<compile_context>
chip_gen: v5e
topology: v5e:2x2
jax: 0.10.0
libtpu: 0.0.40
codegen_flags: <defaults>
</compile_context>

<pallas_src>
import functools

import jax
import jax.numpy as jnp
from jax import lax
from jax.experimental import pallas as pl
from jax.experimental.pallas import tpu as pltpu


# ============================================================================
# Pallas kernel: fused dual-call-site channel attention.
# One grid step = one attention call-site (Attention_Qeury or
# Attention_Key_Value), processing ALL batch elements of that site.
# Per (batch, head): L2-normalize(q,k over HW) -> q@k^T -> temperature ->
# softmax -> reassociated projection (Wp_h @ P) @ V_h accumulated over heads,
# plus the project_out bias.
# ============================================================================
def _dual_channel_attn_kernel(q_ref, k_ref, v_ref, temp_ref, wp_ref, bp_ref,
                              o_ref, *, num_heads):
    site = pl.program_id(0)               # which attention call-site (0 or 1)
    nb, c_total, _ = q_ref.shape          # block: (B, C, HW)
    ch = c_total // num_heads

    wp = wp_ref[...]                      # (C, C)  project_out weight (this site)
    bias = bp_ref[...]                    # (C, 1)  project_out bias   (this site)

    for b in range(nb):                   # static unroll (B is small)
        acc = None
        for h in range(num_heads):        # static unroll
            qh = q_ref[b, pl.ds(h * ch, ch), :]          # (ch, HW)
            kh = k_ref[b, pl.ds(h * ch, ch), :]
            vh = v_ref[b, pl.ds(h * ch, ch), :]

            # F.normalize(dim=-1): L2 normalization along HW (the lane axis).
            qn = qh * lax.rsqrt(jnp.sum(qh * qh, axis=-1, keepdims=True) + 1e-12)
            kn = kh * lax.rsqrt(jnp.sum(kh * kh, axis=-1, keepdims=True) + 1e-12)

            # Scores: contraction over HW on the MXU, bf16 in / f32 accumulate.
            # (Contracting dim 1 of both operands == q @ k^T; checked that
            # Mosaic handles this dot_general without an extra explicit
            # transpose of the small (ch, HW) operand at these shapes.)
            s = lax.dot_general(qn.astype(jnp.bfloat16), kn.astype(jnp.bfloat16),
                                (((1,), (1,)), ((), ())),
                                preferred_element_type=jnp.float32)   # (ch, ch)
            s = s * temp_ref[site, h]      # per-head temperature (SMEM scalar)

            # Softmax over the last (channel) axis; reciprocal goes to the EUP.
            m = jnp.max(s, axis=-1, keepdims=True)
            p = jnp.exp(s - m)
            p = p * pl.reciprocal(jnp.sum(p, axis=-1, keepdims=True), approx=True)

            # Reassociated projection: (Wp[:, h] @ P) @ V_h, summed over heads.
            wpp = jnp.dot(wp[:, h * ch:(h + 1) * ch].astype(jnp.bfloat16),
                          p.astype(jnp.bfloat16),
                          preferred_element_type=jnp.float32)         # (C, ch)
            contrib = jnp.dot(wpp.astype(jnp.bfloat16),
                              vh.astype(jnp.bfloat16),
                              preferred_element_type=jnp.float32)     # (C, HW)
            acc = contrib if acc is None else acc + contrib

        o_ref[b] = (acc + bias).astype(o_ref.dtype)


def dual_channel_attention_pallas(qkv_a, qkv_b, pa, pb, num_heads):
    """Fused attention core for both call-sites of TransformerBlock_QKV.

    qkv_a / qkv_b: (q, k, v) tuples, each (B, C, H, W) f32.
    pa / pb: parameter dicts with 'temperature' (heads,), 'proj_w' (C, C),
             'proj_b' (C,).
    Returns (out_a, out_b), each (B, C, H, W).
    """
    q1, k1, v1 = qkv_a
    q2, k2, v2 = qkv_b
    B, C, H, W = q1.shape
    assert C % num_heads == 0
    HW = H * W

    # NCHW already has H*W contiguous last -> reshape is free, no transposes.
    q = jnp.concatenate([q1.reshape(B, C, HW), q2.reshape(B, C, HW)], axis=0)
    k = jnp.concatenate([k1.reshape(B, C, HW), k2.reshape(B, C, HW)], axis=0)
    v = jnp.concatenate([v1.reshape(B, C, HW), v2.reshape(B, C, HW)], axis=0)
    temp = jnp.stack([pa['temperature'], pb['temperature']], axis=0)   # (2, heads)
    wp = jnp.stack([pa['proj_w'], pb['proj_w']], axis=0)               # (2, C, C)
    bp = jnp.stack([pa['proj_b'], pb['proj_b']], axis=0).reshape(2, C, 1)

    kernel = functools.partial(_dual_channel_attn_kernel, num_heads=num_heads)
    out = pl.pallas_call(
        kernel,
        out_shape=jax.ShapeDtypeStruct((2 * B, C, HW), q1.dtype),
        grid_spec=pltpu.PrefetchScalarGridSpec(
            num_scalar_prefetch=0,
            grid=(2,),  # one step per attention call-site; all batches inside
            in_specs=[
                pl.BlockSpec((B, C, HW), lambda s: (s, 0, 0)),          # q
                pl.BlockSpec((B, C, HW), lambda s: (s, 0, 0)),          # k
                pl.BlockSpec((B, C, HW), lambda s: (s, 0, 0)),          # v
                pl.BlockSpec(memory_space=pltpu.MemorySpace.SMEM),      # temperature
                pl.BlockSpec((None, C, C), lambda s: (s, 0, 0)),        # proj W (squeezed lead)
                pl.BlockSpec((None, C, 1), lambda s: (s, 0, 0)),        # proj b (squeezed lead)
            ],
            out_specs=pl.BlockSpec((B, C, HW), lambda s: (s, 0, 0)),
        ),
        compiler_params=pltpu.CompilerParams(
            dimension_semantics=("parallel",)),
    )(q, k, v, temp, wp, bp)

    out = out.reshape(2, B, C, H, W)
    return out[0], out[1]


def dual_channel_attention_ref(qkv_a, qkv_b, pa, pb, num_heads):
    """Pure-JAX reference for the fused attention core (both call-sites)."""
    def one(q, k, v, temperature, proj_w, proj_b):
        B, C, H, W = q.shape
        HW = H * W
        ch = C // num_heads
        qh = q.reshape(B, num_heads, ch, HW)
        kh = k.reshape(B, num_heads, ch, HW)
        vh = v.reshape(B, num_heads, ch, HW)
        qn = qh * lax.rsqrt(jnp.sum(qh * qh, axis=-1, keepdims=True) + 1e-12)
        kn = kh * lax.rsqrt(jnp.sum(kh * kh, axis=-1, keepdims=True) + 1e-12)
        s = jnp.einsum('bhcd,bhed->bhce', qn, kn) * temperature[None, :, None, None]
        p = jax.nn.softmax(s, axis=-1)
        out = jnp.einsum('bhce,bhed->bhcd', p, vh).reshape(B, C, HW)
        out = jnp.einsum('oc,bcd->bod', proj_w, out) + proj_b[None, :, None]
        return out.reshape(B, C, H, W)
    return (one(*qkv_a, pa['temperature'], pa['proj_w'], pa['proj_b']),
            one(*qkv_b, pb['temperature'], pb['proj_w'], pb['proj_b']))


# ============================================================================
# Plain-JAX building blocks (depthwise/grouped 3x3 convs, 1x1 convs, LN, GELU)
# ============================================================================
def gelu(x):
    return jax.nn.gelu(x, approximate=False)          # PyTorch nn.GELU (erf)


def conv1x1(x, w, b=None):
    # x: (B, Cin, H, W); w: (Cout, Cin); b: (Cout,)
    y = jnp.einsum('oc,bchw->bohw', w, x)
    if b is not None:
        y = y + b[None, :, None, None]
    return y


def conv3x3_grouped(x, w, b, groups):
    # x: (B, Cin, H, W); w: (Cout, Cin//groups, 3, 3); stride 1, padding 1.
    y = lax.conv_general_dilated(
        x, w, window_strides=(1, 1), padding=((1, 1), (1, 1)),
        dimension_numbers=('NCHW', 'OIHW', 'NCHW'),
        feature_group_count=groups)
    if b is not None:
        y = y + b[None, :, None, None]
    return y


def layernorm_channel(x, eps=1e-5):
    # to_3d -> WithBias_LayerNorm (parameter-free mean/var normalize) -> to_4d.
    mu = jnp.mean(x, axis=1, keepdims=True)
    var = jnp.mean(jnp.square(x - mu), axis=1, keepdims=True)
    return (x - mu) * lax.rsqrt(var + eps)


# ============================================================================
# Module forwards (mirrors the PyTorch graph)
# ============================================================================
def res_module(x, p):
    x1 = conv3x3_grouped(x, p['w3'], p['b3'], groups=x.shape[1])
    x1 = gelu(x1)
    x1 = conv1x1(x1, p['w1'], p['b1'])
    return x1 + x


def feed_forward(x, p):
    dim = x.shape[1]
    x1 = conv3x3_grouped(x, p['dw1_w'], p['dw1_b'], groups=dim)
    x1 = conv1x1(x1, p['pm_w'], p['pm_b'])
    x1 = gelu(x1)
    x2 = conv3x3_grouped(x1, p['dw2_w'], p['dw2_b'], groups=x1.shape[1])
    return conv1x1(x2, p['po_w'], p['po_b'])


def attention_query_pre(x, feature, p):
    """Attention_Qeury up to (but excluding) the fused attention core."""
    qkv = conv1x1(x, p['qkv_w'], p['qkv_b'])
    qkv = conv3x3_grouped(qkv, p['qkv_dw_w'], p['qkv_dw_b'], groups=qkv.shape[1])
    q, k, v = jnp.split(qkv, 3, axis=1)
    qf = jnp.concatenate([q, feature], axis=1)
    qf = conv3x3_grouped(qf, p['qdw1_w'], p['qdw1_b'], groups=qf.shape[1])
    qf = gelu(qf)
    q = conv1x1(qf, p['qdw2_w'], p['qdw2_b'])
    return q, k, v


def attention_key_value_pre(x, f1, f2, p):
    """Attention_Key_Value up to (but excluding) the fused attention core."""
    qkv = conv1x1(x, p['qkv_w'], p['qkv_b'])
    qkv = conv3x3_grouped(qkv, p['qkv_dw_w'], p['qkv_dw_b'], groups=qkv.shape[1])
    q, k, v = jnp.split(qkv, 3, axis=1)
    kf = jnp.concatenate([k, f1], axis=1)
    kf = conv3x3_grouped(kf, p['kdw1_w'], p['kdw1_b'], groups=kf.shape[1])
    kf = gelu(kf)
    k = conv1x1(kf, p['kdw2_w'], p['kdw2_b'])
    vf = jnp.concatenate([v, f2], axis=1)
    vf = conv3x3_grouped(vf, p['vdw1_w'], p['vdw1_b'], groups=vf.shape[1])
    vf = gelu(vf)
    v = conv1x1(vf, p['vdw2_w'], p['vdw2_b'])
    return q, k, v


def transformer_block_qkv(x, f1, f2, f3, p, num_heads, attn_core):
    nx = layernorm_channel(x)
    qkv_a = attention_query_pre(nx, f1, p['attn_q'])
    qkv_b = attention_key_value_pre(nx, f2, f3, p['attn_kv'])
    # Both attention cores (incl. project_out) in ONE fused pallas_call.
    aq, akv = attn_core(qkv_a, qkv_b, p['attn_q'], p['attn_kv'], num_heads)
    fus = jnp.concatenate([aq, akv], axis=1)
    fus = conv3x3_grouped(fus, p['fus_dw_w'], p['fus_dw_b'], groups=fus.shape[1])
    fus = gelu(fus)
    fus = conv1x1(fus, p['fus_pw_w'], p['fus_pw_b'])
    x = x + fus
    x = x + feed_forward(layernorm_channel(x), p['ffn'])
    return x


def global_perception(x, y, p, num_heads, attn_core):
    dim = x.shape[1]
    ly = layernorm_channel(y)
    qkv = conv1x1(ly, p['pre_w1'], p['pre_b1'])                       # dim_pre -> 3*dim
    qkv = conv3x3_grouped(qkv, p['pre_w2'], p['pre_b2'], groups=dim)  # groups=dim
    f1, f2, f3 = jnp.split(qkv, 3, axis=1)
    return transformer_block_qkv(x, f1, f2, f3, p['tb'], num_heads, attn_core)


def local_perception(x, y, p):
    c = x.shape[1]
    deg = layernorm_channel(y)
    deg = conv1x1(deg, p['deg_w1'], p['deg_b1'])
    deg = conv3x3_grouped(deg, p['deg_w2'], p['deg_b2'], groups=c)    # c -> 2c
    deg1 = deg[:, c:, :, :]
    deg2 = deg[:, :c, :, :]
    inp = layernorm_channel(x)
    inp = conv3x3_grouped(inp, p['inp_w'], p['inp_b'], groups=c)      # c -> 2c
    inp1 = inp[:, c:, :, :]
    inp2 = inp[:, :c, :, :]

    mk = jnp.concatenate([inp1, deg1], axis=1)
    mk = conv3x3_grouped(mk, p['mk_dw_w'], p['mk_dw_b'], groups=c)
    mk = gelu(mk)
    mk = conv1x1(mk, p['mk_pw_w'], p['mk_pw_b'])
    mk = jax.nn.sigmoid(mk)
    mk_mul = mk * deg1

    dk = jnp.concatenate([inp2, deg2], axis=1)
    dk = conv3x3_grouped(dk, p['dk_dw_w'], p['dk_dw_b'], groups=c)
    dk = gelu(dk)
    dk = conv1x1(dk, p['dk_pw_w'], p['dk_pw_b'])
    dk = jax.nn.sigmoid(dk)
    dk_mul = dk * inp2

    out = conv1x1(jnp.concatenate([dk_mul, mk_mul], axis=1),
                  p['fus1_w'], p['fus1_b']) + x
    f = conv3x3_grouped(out, p['ffn_dw_w'], p['ffn_dw_b'], groups=c)
    f = gelu(f)
    f = conv1x1(f, p['ffn_pw_w'], p['ffn_pw_b'])
    return f + out


def prompt_pgm(x, y, p, num_heads, attn_core):
    out1 = global_perception(x, y, p['g2p'], num_heads, attn_core)
    out2 = local_perception(x, y, p['l2p'])
    out = jnp.concatenate([out1, out2], axis=1)
    return conv1x1(out, p['conv_w'], p['conv_b']) + x


def map_tensor_fusion(x, feature_map, params, *, num_heads, attn_core):
    x2 = x
    for rp in params['res2']:
        x2 = res_module(x2, rp)
    # norm2: LayerNorm_type is the BiasFree_LayerNorm *class* (not the string
    # 'BiasFree') in the PyTorch code, so the WithBias variant is selected.
    x2 = layernorm_channel(x2)
    x2 = prompt_pgm(x2, feature_map, params['dpm'], num_heads, attn_core)
    return jax.nn.relu(x2)


# ============================================================================
# Deterministic synthetic parameters matching the PyTorch module's shapes.
# ============================================================================
def _param_stream(key):
    state = [key]
    def nxt(shape, scale=0.1):
        state[0], sub = jax.random.split(state[0])
        return (scale * jax.random.normal(sub, shape)).astype(jnp.float32)
    return nxt


def init_params(key, C, num_heads):
    nxt = _param_stream(key)

    def conv1x1_p(cin, cout):
        return nxt((cout, cin)), nxt((cout,))

    def conv3x3_p(cin, cout, groups):
        return nxt((cout, cin // groups, 3, 3)), nxt((cout,))

    def attn_q_params():
        p = {'temperature': jnp.ones((num_heads,), jnp.float32)}
        p['qkv_w'], p['qkv_b'] = conv1x1_p(C, 3 * C)
        p['qkv_dw_w'], p['qkv_dw_b'] = conv3x3_p(3 * C, 3 * C, 3 * C)
        p['qdw1_w'], p['qdw1_b'] = conv3x3_p(2 * C, 2 * C, 2 * C)
        p['qdw2_w'], p['qdw2_b'] = conv1x1_p(2 * C, C)
        p['proj_w'], p['proj_b'] = conv1x1_p(C, C)
        return p

    def attn_kv_params():
        p = {'temperature': jnp.ones((num_heads,), jnp.float32)}
        p['qkv_w'], p['qkv_b'] = conv1x1_p(C, 3 * C)
        p['qkv_dw_w'], p['qkv_dw_b'] = conv3x3_p(3 * C, 3 * C, 3 * C)
        p['kdw1_w'], p['kdw1_b'] = conv3x3_p(2 * C, 2 * C, 2 * C)
        p['kdw2_w'], p['kdw2_b'] = conv1x1_p(2 * C, C)
        p['vdw1_w'], p['vdw1_b'] = conv3x3_p(2 * C, 2 * C, 2 * C)
        p['vdw2_w'], p['vdw2_b'] = conv1x1_p(2 * C, C)
        p['proj_w'], p['proj_b'] = conv1x1_p(C, C)
        return p

    hidden = 3 * C
    ffn = {}
    ffn['dw1_w'], ffn['dw1_b'] = conv3x3_p(C, hidden, C)
    ffn['pm_w'], ffn['pm_b'] = conv1x1_p(hidden, hidden)
    ffn['dw2_w'], ffn['dw2_b'] = conv3x3_p(hidden, hidden, hidden)
    ffn['po_w'], ffn['po_b'] = conv1x1_p(hidden, C)

    tb = {'attn_q': attn_q_params(), 'attn_kv': attn_kv_params(), 'ffn': ffn}
    tb['fus_dw_w'], tb['fus_dw_b'] = conv3x3_p(2 * C, 2 * C, 2 * C)
    tb['fus_pw_w'], tb['fus_pw_b'] = conv1x1_p(2 * C, C)

    g2p = {'tb': tb}
    g2p['pre_w1'], g2p['pre_b1'] = conv1x1_p(C, 3 * C)
    g2p['pre_w2'], g2p['pre_b2'] = conv3x3_p(3 * C, 3 * C, C)

    l2p = {}
    l2p['deg_w1'], l2p['deg_b1'] = conv1x1_p(C, C)
    l2p['deg_w2'], l2p['deg_b2'] = conv3x3_p(C, 2 * C, C)
    l2p['inp_w'], l2p['inp_b'] = conv3x3_p(C, 2 * C, C)
    l2p['mk_dw_w'], l2p['mk_dw_b'] = conv3x3_p(2 * C, 2 * C, C)
    l2p['mk_pw_w'], l2p['mk_pw_b'] = conv1x1_p(2 * C, C)
    l2p['dk_dw_w'], l2p['dk_dw_b'] = conv3x3_p(2 * C, 2 * C, C)
    l2p['dk_pw_w'], l2p['dk_pw_b'] = conv1x1_p(2 * C, C)
    l2p['fus1_w'], l2p['fus1_b'] = conv1x1_p(2 * C, C)
    l2p['ffn_dw_w'], l2p['ffn_dw_b'] = conv3x3_p(C, C, C)
    l2p['ffn_pw_w'], l2p['ffn_pw_b'] = conv1x1_p(C, C)

    dpm = {'g2p': g2p, 'l2p': l2p}
    dpm['conv_w'], dpm['conv_b'] = conv1x1_p(2 * C, C)

    res2 = []
    for _ in range(3):
        r = {}
        r['w3'], r['b3'] = conv3x3_p(C, C, C)
        r['w1'], r['b1'] = conv1x1_p(C, C)
        res2.append(r)

    return {'res2': res2, 'dpm': dpm}


if __name__ == "__main__":
    B, C, H, W = 2, 32, 16, 16        # dim = 32 (histoformer default)
    num_heads = 1

    key = jax.random.PRNGKey(0)
    kp, kx, km = jax.random.split(key, 3)
    params = init_params(kp, C, num_heads)
    x = jax.random.normal(kx, (B, C, H, W), dtype=jnp.float32)
    feature_map = jax.random.normal(km, (B, C, H, W), dtype=jnp.float32)

    fwd_pallas = jax.jit(functools.partial(
        map_tensor_fusion, num_heads=num_heads,
        attn_core=dual_channel_attention_pallas))
    fwd_ref = jax.jit(functools.partial(
        map_tensor_fusion, num_heads=num_heads,
        attn_core=dual_channel_attention_ref))

    out = jax.block_until_ready(fwd_pallas(x, feature_map, params))
    ref = jax.block_until_ready(fwd_ref(x, feature_map, params))

    assert out.shape == (B, C, H, W)
    max_err = float(jnp.max(jnp.abs(out - ref)))
    # bf16 MXU operands + approx reciprocal -> slightly looser tolerance.
    assert jnp.allclose(out, ref, atol=2e-2, rtol=2e-2), f"max abs err {max_err}"

    print("KERNEL_OK")
</pallas_src>

<mosaic_0001>
module attributes {stable_mosaic.version = 11 : i64} {
  func.func @_dual_channel_attn_kernel(%arg0: i32, %arg1: memref<2x32x256xf32, #tpu.memory_space<vmem>>, %arg2: memref<2x32x256xf32, #tpu.memory_space<vmem>>, %arg3: memref<2x32x256xf32, #tpu.memory_space<vmem>>, %arg4: memref<2x1xf32, #tpu.memory_space<smem>>, %arg5: memref<1x32x32xf32, #tpu.memory_space<vmem>>, %arg6: memref<1x32x1xf32, #tpu.memory_space<vmem>>, %arg7: memref<2x32x256xf32, #tpu.memory_space<vmem>>) attributes {dimension_semantics = [#tpu.dimension_semantics<parallel>], iteration_bounds = array<i64: 2>, scalar_prefetch = 0 : i64, scratch_operands = 0 : i64, tpu.core_type = #tpu.core_type<tc>, window_params = [{transform_indices = @transform_0, window_bounds = array<i64: 2, 32, 256>}, {transform_indices = @transform_1, window_bounds = array<i64: 2, 32, 256>}, {transform_indices = @transform_2, window_bounds = array<i64: 2, 32, 256>}, {transform_indices = @transform_3, window_bounds = array<i64: 2, 1>}, {transform_indices = @transform_4, window_bounds = array<i64: 1, 32, 32>}, {transform_indices = @transform_5, window_bounds = array<i64: 1, 32, 1>}, {transform_indices = @transform_6, window_bounds = array<i64: 2, 32, 256>}]} {
    %c0 = arith.constant 0 : index
    %c0_0 = arith.constant 0 : index
    %c0_1 = arith.constant 0 : index
    %0 = vector.load %arg5[%c0, %c0_0, %c0_1] : memref<1x32x32xf32, #tpu.memory_space<vmem>>, vector<1x32x32xf32>
    %1 = vector.shape_cast %0 : vector<1x32x32xf32> to vector<32x32xf32>
    %c0_2 = arith.constant 0 : index
    %c0_3 = arith.constant 0 : index
    %c0_4 = arith.constant 0 : index
    %2 = vector.load %arg6[%c0_2, %c0_3, %c0_4] : memref<1x32x1xf32, #tpu.memory_space<vmem>>, vector<1x32x1xf32>
    %3 = vector.shape_cast %2 : vector<1x32x1xf32> to vector<32x1xf32>
    %c0_5 = arith.constant 0 : index
    %c0_6 = arith.constant 0 : index
    %c0_7 = arith.constant 0 : index
    %4 = vector.load %arg1[%c0_5, %c0_6, %c0_7] : memref<2x32x256xf32, #tpu.memory_space<vmem>>, vector<1x32x256xf32>
    %5 = vector.shape_cast %4 : vector<1x32x256xf32> to vector<32x256xf32>
    %c0_8 = arith.constant 0 : index
    %c0_9 = arith.constant 0 : index
    %c0_10 = arith.constant 0 : index
    %6 = vector.load %arg2[%c0_8, %c0_9, %c0_10] : memref<2x32x256xf32, #tpu.memory_space<vmem>>, vector<1x32x256xf32>
    %7 = vector.shape_cast %6 : vector<1x32x256xf32> to vector<32x256xf32>
    %c0_11 = arith.constant 0 : index
    %c0_12 = arith.constant 0 : index
    %c0_13 = arith.constant 0 : index
    %8 = vector.load %arg3[%c0_11, %c0_12, %c0_13] : memref<2x32x256xf32, #tpu.memory_space<vmem>>, vector<1x32x256xf32>
    %9 = vector.shape_cast %8 : vector<1x32x256xf32> to vector<32x256xf32>
    %10 = arith.mulf %5, %5 : vector<32x256xf32>
    %cst = arith.constant dense<0.000000e+00> : vector<32xf32>
    %11 = vector.multi_reduction <add>, %10, %cst [1] : vector<32x256xf32> to vector<32xf32>
    %12 = vector.shape_cast %11 : vector<32xf32> to vector<32x1xf32>
    %cst_14 = arith.constant 9.99999996E-13 : f32
    %13 = vector.broadcast %cst_14 : f32 to vector<32x1xf32>
    %14 = arith.addf %12, %13 : vector<32x1xf32>
    %15 = math.rsqrt %14 : vector<32x1xf32>
    %16 = vector.broadcast %15 : vector<32x1xf32> to vector<32x256xf32>
    %17 = arith.mulf %5, %16 : vector<32x256xf32>
    %18 = arith.mulf %7, %7 : vector<32x256xf32>
    %cst_15 = arith.constant dense<0.000000e+00> : vector<32xf32>
    %19 = vector.multi_reduction <add>, %18, %cst_15 [1] : vector<32x256xf32> to vector<32xf32>
    %20 = vector.shape_cast %19 : vector<32xf32> to vector<32x1xf32>
    %cst_16 = arith.constant 9.99999996E-13 : f32
    %21 = vector.broadcast %cst_16 : f32 to vector<32x1xf32>
    %22 = arith.addf %20, %21 : vector<32x1xf32>
    %23 = math.rsqrt %22 : vector<32x1xf32>
    %24 = vector.broadcast %23 : vector<32x1xf32> to vector<32x256xf32>
    %25 = arith.mulf %7, %24 : vector<32x256xf32>
    %26 = arith.truncf %17 : vector<32x256xf32> to vector<32x256xbf16>
    %27 = arith.truncf %25 : vector<32x256xf32> to vector<32x256xbf16>
    %cst_17 = arith.constant dense<0.000000e+00> : vector<32x32xf32>
    %28 = tpu.matmul %26, %27, %cst_17 {dimension_numbers = #tpu.dot_dimension_numbers<[1], [1], [0], [0], [0, 0, 1, 0], [], []>} : vector<32x256xbf16>, vector<32x256xbf16>, vector<32x32xf32> -> vector<32x32xf32>
    %29 = arith.index_cast %arg0 : i32 to index
    %c0_18 = arith.constant 0 : index
    %30 = memref.load %arg4[%29, %c0_18] : memref<2x1xf32, #tpu.memory_space<smem>>
    %31 = vector.broadcast %30 : f32 to vector<32x32xf32>
    %32 = arith.mulf %28, %31 : vector<32x32xf32>
    %cst_19 = arith.constant dense<0xFF800000> : vector<32xf32>
    %33 = vector.multi_reduction <maximumf>, %32, %cst_19 [1] : vector<32x32xf32> to vector<32xf32>
    %34 = vector.shape_cast %33 : vector<32xf32> to vector<32x1xf32>
    %35 = vector.broadcast %34 : vector<32x1xf32> to vector<32x32xf32>
    %36 = arith.subf %32, %35 : vector<32x32xf32>
    %37 = math.exp %36 : vector<32x32xf32>
    %cst_20 = arith.constant dense<0.000000e+00> : vector<32xf32>
    %38 = vector.multi_reduction <add>, %37, %cst_20 [1] : vector<32x32xf32> to vector<32xf32>
    %39 = vector.shape_cast %38 : vector<32xf32> to vector<32x1xf32>
    %40 = tpu.reciprocal %39 {approx = true} : vector<32x1xf32> -> vector<32x1xf32>
    %41 = vector.broadcast %40 : vector<32x1xf32> to vector<32x32xf32>
    %42 = arith.mulf %37, %41 : vector<32x32xf32>
    %43 = arith.truncf %1 : vector<32x32xf32> to vector<32x32xbf16>
    %44 = arith.truncf %42 : vector<32x32xf32> to vector<32x32xbf16>
    %cst_21 = arith.constant dense<0.000000e+00> : vector<32x32xf32>
    %45 = tpu.matmul %43, %44, %cst_21 {dimension_numbers = #tpu.dot_dimension_numbers<[1], [0], [0], [1], [0, 0, 1, 1], [], []>} : vector<32x32xbf16>, vector<32x32xbf16>, vector<32x32xf32> -> vector<32x32xf32>
    %46 = arith.truncf %45 : vector<32x32xf32> to vector<32x32xbf16>
    %47 = arith.truncf %9 : vector<32x256xf32> to vector<32x256xbf16>
    %cst_22 = arith.constant dense<0.000000e+00> : vector<32x256xf32>
    %48 = tpu.matmul %46, %47, %cst_22 {dimension_numbers = #tpu.dot_dimension_numbers<[1], [0], [0], [1], [0, 0, 1, 1], [], []>} : vector<32x32xbf16>, vector<32x256xbf16>, vector<32x256xf32> -> vector<32x256xf32>
    %49 = vector.broadcast %3 : vector<32x1xf32> to vector<32x256xf32>
    %50 = arith.addf %48, %49 : vector<32x256xf32>
    %c0_23 = arith.constant 0 : index
    %c0_24 = arith.constant 0 : index
    %c0_25 = arith.constant 0 : index
    %51 = vector.load %arg7[%c0_23, %c0_24, %c0_25] : memref<2x32x256xf32, #tpu.memory_space<vmem>>, vector<1x32x256xf32>
    %52 = vector.shape_cast %51 : vector<1x32x256xf32> to vector<32x256xf32>
    %53 = vector.shape_cast %50 : vector<32x256xf32> to vector<1x32x256xf32>
    tpu.vector_store %arg7[%c0_23, %c0_24, %c0_25], %53 {strides = array<i32>} : memref<2x32x256xf32, #tpu.memory_space<vmem>>, vector<1x32x256xf32>,
    %c1 = arith.constant 1 : index
    %c0_26 = arith.constant 0 : index
    %c0_27 = arith.constant 0 : index
    %54 = vector.load %arg1[%c1, %c0_26, %c0_27] : memref<2x32x256xf32, #tpu.memory_space<vmem>>, vector<1x32x256xf32>
    %55 = vector.shape_cast %54 : vector<1x32x256xf32> to vector<32x256xf32>
    %c1_28 = arith.constant 1 : index
    %c0_29 = arith.constant 0 : index
    %c0_30 = arith.constant 0 : index
    %56 = vector.load %arg2[%c1_28, %c0_29, %c0_30] : memref<2x32x256xf32, #tpu.memory_space<vmem>>, vector<1x32x256xf32>
    %57 = vector.shape_cast %56 : vector<1x32x256xf32> to vector<32x256xf32>
    %c1_31 = arith.constant 1 : index
    %c0_32 = arith.constant 0 : index
    %c0_33 = arith.constant 0 : index
    %58 = vector.load %arg3[%c1_31, %c0_32, %c0_33] : memref<2x32x256xf32, #tpu.memory_space<vmem>>, vector<1x32x256xf32>
    %59 = vector.shape_cast %58 : vector<1x32x256xf32> to vector<32x256xf32>
    %60 = arith.mulf %55, %55 : vector<32x256xf32>
    %cst_34 = arith.constant dense<0.000000e+00> : vector<32xf32>
    %61 = vector.multi_reduction <add>, %60, %cst_34 [1] : vector<32x256xf32> to vector<32xf32>
    %62 = vector.shape_cast %61 : vector<32xf32> to vector<32x1xf32>
    %cst_35 = arith.constant 9.99999996E-13 : f32
    %63 = vector.broadcast %cst_35 : f32 to vector<32x1xf32>
    %64 = arith.addf %62, %63 : vector<32x1xf32>
    %65 = math.rsqrt %64 : vector<32x1xf32>
    %66 = vector.broadcast %65 : vector<32x1xf32> to vector<32x256xf32>
    %67 = arith.mulf %55, %66 : vector<32x256xf32>
    %68 = arith.mulf %57, %57 : vector<32x256xf32>
    %cst_36 = arith.constant dense<0.000000e+00> : vector<32xf32>
    %69 = vector.multi_reduction <add>, %68, %cst_36 [1] : vector<32x256xf32> to vector<32xf32>
    %70 = vector.shape_cast %69 : vector<32xf32> to vector<32x1xf32>
    %cst_37 = arith.constant 9.99999996E-13 : f32
    %71 = vector.broadcast %cst_37 : f32 to vector<32x1xf32>
    %72 = arith.addf %70, %71 : vector<32x1xf32>
    %73 = math.rsqrt %72 : vector<32x1xf32>
    %74 = vector.broadcast %73 : vector<32x1xf32> to vector<32x256xf32>
    %75 = arith.mulf %57, %74 : vector<32x256xf32>
    %76 = arith.truncf %67 : vector<32x256xf32> to vector<32x256xbf16>
    %77 = arith.truncf %75 : vector<32x256xf32> to vector<32x256xbf16>
    %cst_38 = arith.constant dense<0.000000e+00> : vector<32x32xf32>
    %78 = tpu.matmul %76, %77, %cst_38 {dimension_numbers = #tpu.dot_dimension_numbers<[1], [1], [0], [0], [0, 0, 1, 0], [], []>} : vector<32x256xbf16>, vector<32x256xbf16>, vector<32x32xf32> -> vector<32x32xf32>
    %79 = arith.index_cast %arg0 : i32 to index
    %c0_39 = arith.constant 0 : index
    %80 = memref.load %arg4[%79, %c0_39] : memref<2x1xf32, #tpu.memory_space<smem>>
    %81 = vector.broadcast %80 : f32 to vector<32x32xf32>
    %82 = arith.mulf %78, %81 : vector<32x32xf32>
    %cst_40 = arith.constant dense<0xFF800000> : vector<32xf32>
    %83 = vector.multi_reduction <maximumf>, %82, %cst_40 [1] : vector<32x32xf32> to vector<32xf32>
    %84 = vector.shape_cast %83 : vector<32xf32> to vector<32x1xf32>
    %85 = vector.broadcast %84 : vector<32x1xf32> to vector<32x32xf32>
    %86 = arith.subf %82, %85 : vector<32x32xf32>
    %87 = math.exp %86 : vector<32x32xf32>
    %cst_41 = arith.constant dense<0.000000e+00> : vector<32xf32>
    %88 = vector.multi_reduction <add>, %87, %cst_41 [1] : vector<32x32xf32> to vector<32xf32>
    %89 = vector.shape_cast %88 : vector<32xf32> to vector<32x1xf32>
    %90 = tpu.reciprocal %89 {approx = true} : vector<32x1xf32> -> vector<32x1xf32>
    %91 = vector.broadcast %90 : vector<32x1xf32> to vector<32x32xf32>
    %92 = arith.mulf %87, %91 : vector<32x32xf32>
    %93 = arith.truncf %1 : vector<32x32xf32> to vector<32x32xbf16>
    %94 = arith.truncf %92 : vector<32x32xf32> to vector<32x32xbf16>
    %cst_42 = arith.constant dense<0.000000e+00> : vector<32x32xf32>
    %95 = tpu.matmul %93, %94, %cst_42 {dimension_numbers = #tpu.dot_dimension_numbers<[1], [0], [0], [1], [0, 0, 1, 1], [], []>} : vector<32x32xbf16>, vector<32x32xbf16>, vector<32x32xf32> -> vector<32x32xf32>
    %96 = arith.truncf %95 : vector<32x32xf32> to vector<32x32xbf16>
    %97 = arith.truncf %59 : vector<32x256xf32> to vector<32x256xbf16>
    %cst_43 = arith.constant dense<0.000000e+00> : vector<32x256xf32>
    %98 = tpu.matmul %96, %97, %cst_43 {dimension_numbers = #tpu.dot_dimension_numbers<[1], [0], [0], [1], [0, 0, 1, 1], [], []>} : vector<32x32xbf16>, vector<32x256xbf16>, vector<32x256xf32> -> vector<32x256xf32>
    %99 = vector.broadcast %3 : vector<32x1xf32> to vector<32x256xf32>
    %100 = arith.addf %98, %99 : vector<32x256xf32>
    %c1_44 = arith.constant 1 : index
    %c0_45 = arith.constant 0 : index
    %c0_46 = arith.constant 0 : index
    %101 = vector.load %arg7[%c1_44, %c0_45, %c0_46] : memref<2x32x256xf32, #tpu.memory_space<vmem>>, vector<1x32x256xf32>
    %102 = vector.shape_cast %101 : vector<1x32x256xf32> to vector<32x256xf32>
    %103 = vector.shape_cast %100 : vector<32x256xf32> to vector<1x32x256xf32>
    tpu.vector_store %arg7[%c1_44, %c0_45, %c0_46], %103 {strides = array<i32>} : memref<2x32x256xf32, #tpu.memory_space<vmem>>, vector<1x32x256xf32>,
    return
  }
  func.func @transform_0(%arg0: i32) -> (i32, i32, i32) {
    %c0_i32 = arith.constant 0 : i32
    %c0_i32_0 = arith.constant 0 : i32
    %c0_i32_1 = arith.constant 0 : i32
    return %arg0, %c0_i32, %c0_i32_0 : i32, i32, i32
  }
  func.func @transform_1(%arg0: i32) -> (i32, i32, i32) {
    %c0_i32 = arith.constant 0 : i32
    %c0_i32_0 = arith.constant 0 : i32
    %c0_i32_1 = arith.constant 0 : i32
    return %arg0, %c0_i32, %c0_i32_0 : i32, i32, i32
  }
  func.func @transform_2(%arg0: i32) -> (i32, i32, i32) {
    %c0_i32 = arith.constant 0 : i32
    %c0_i32_0 = arith.constant 0 : i32
    %c0_i32_1 = arith.constant 0 : i32
    return %arg0, %c0_i32, %c0_i32_0 : i32, i32, i32
  }
  func.func @transform_3(%arg0: i32) -> (i32, i32) {
    %c0_i32 = arith.constant 0 : i32
    %c0_i32_0 = arith.constant 0 : i32
    %c0_i32_1 = arith.constant 0 : i32
    return %c0_i32, %c0_i32_0 : i32, i32
  }
  func.func @transform_4(%arg0: i32) -> (i32, i32, i32) {
    %c0_i32 = arith.constant 0 : i32
    %c0_i32_0 = arith.constant 0 : i32
    %c0_i32_1 = arith.constant 0 : i32
    return %arg0, %c0_i32, %c0_i32_0 : i32, i32, i32
  }
  func.func @transform_5(%arg0: i32) -> (i32, i32, i32) {
    %c0_i32 = arith.constant 0 : i32
    %c0_i32_0 = arith.constant 0 : i32
    %c0_i32_1 = arith.constant 0 : i32
    return %arg0, %c0_i32, %c0_i32_0 : i32, i32, i32
  }
  func.func @transform_6(%arg0: i32) -> (i32, i32, i32) {
    %c0_i32 = arith.constant 0 : i32
    %c0_i32_0 = arith.constant 0 : i32
    %c0_i32_1 = arith.constant 0 : i32
    return %arg0, %c0_i32, %c0_i32_0 : i32, i32, i32
  }
}

</mosaic_0001>

<llo_original>
// kernel: split.0
$region0: #{split.0}
  #allocation0 [shape = 'u32[2048]{0}', space=vmem, size = 0x2000, scoped, tag = 'scoped memory for split.0']
  #allocation1 [shape = 'u32[2048]{0}', space=vmem, size = 0x2000, scoped, tag = 'scoped memory for split.0']
  #allocation2 [shape = 'u32[2048]{0}', space=vmem, size = 0x2000, scoped, tag = 'scoped memory for split.0']
  #allocation3 [shape = 'u32[2048]{0}', space=vmem, size = 0x2000, scoped, tag = 'scoped memory for split.0']
  #allocation4 [shape = 'u32[2048]{0}', space=vmem, size = 0x2000, scoped, tag = 'scoped memory for split.0']
  #allocation5 [shape = 's32[1]{0}', space=sflag, size = 0x4, scoped, tag = 'scoped memory for split.0']
  %s0 = inlined_call_operand.vmem [shape: f32[2,96,16,16], index: 0, kind: input, shape index: {}]
  %s1 = inlined_call_operand.vmem [shape: bf16[2,32,16,16], index: 1, kind: output, shape index: {}]
  %v2 = vld [vmem:[%s0] sm:$0x3]
  %v3 = vpack.c.bf16 0.0, %v2
  %4 = vst [vmem:[%s1] sm:$0x1] %v3
  %s5 = scalar_lea.vmem %s0, 32
  %v6 = vld [vmem:[%s5] sm:$0x3]
  %s7 = scalar_lea.vmem %s1, 16
  %v8 = vpack.c.bf16 0.0, %v6
  %9 = vst [vmem:[%s7] sm:$0x1] %v8
  %s10 = scalar_lea.vmem %s0, 64
  %v11 = vld [vmem:[%s10] sm:$0x3]
  %s12 = scalar_lea.vmem %s1, 32
  %v13 = vpack.c.bf16 0.0, %v11
  %14 = vst [vmem:[%s12] sm:$0x1] %v13
  %s15 = scalar_lea.vmem %s0, 96
  %v16 = vld [vmem:[%s15] sm:$0x3]
  %s17 = scalar_lea.vmem %s1, 48
  %v18 = vpack.c.bf16 0.0, %v16
  %19 = vst [vmem:[%s17] sm:$0x1] %v18
  %s20 = scalar_lea.vmem %s0, 128
  %v21 = vld [vmem:[%s20] sm:$0x3]
  %s22 = scalar_lea.vmem %s1, 64
  %v23 = vpack.c.bf16 0.0, %v21
  %24 = vst [vmem:[%s22] sm:$0x1] %v23
  %s25 = scalar_lea.vmem %s0, 160
  %v26 = vld [vmem:[%s25] sm:$0x3]
  %s27 = scalar_lea.vmem %s1, 80
  %v28 = vpack.c.bf16 0.0, %v26
  %29 = vst [vmem:[%s27] sm:$0x1] %v28
  %s30 = scalar_lea.vmem %s0, 192
  %v31 = vld [vmem:[%s30] sm:$0x3]
  %s32 = scalar_lea.vmem %s1, 96
  %v33 = vpack.c.bf16 0.0, %v31
  %34 = vst [vmem:[%s32] sm:$0x1] %v33
  %s35 = scalar_lea.vmem %s0, 224
  %v36 = vld [vmem:[%s35] sm:$0x3]
  %s37 = scalar_lea.vmem %s1, 112
  %v38 = vpack.c.bf16 0.0, %v36
  %39 = vst [vmem:[%s37] sm:$0x1] %v38
  %s40 = scalar_lea.vmem %s0, 256
  %v41 = vld [vmem:[%s40] sm:$0x3]
  %s42 = scalar_lea.vmem %s1, 128
  %v43 = vpack.c.bf16 0.0, %v41
  %44 = vst [vmem:[%s42] sm:$0x1] %v43
  %s45 = scalar_lea.vmem %s0, 288
  %v46 = vld [vmem:[%s45] sm:$0x3]
  %s47 = scalar_lea.vmem %s1, 144
  %v48 = vpack.c.bf16 0.0, %v46
  %49 = vst [vmem:[%s47] sm:$0x1] %v48
  %s50 = scalar_lea.vmem %s0, 320
  %v51 = vld [vmem:[%s50] sm:$0x3]
  %s52 = scalar_lea.vmem %s1, 160
  %v53 = vpack.c.bf16 0.0, %v51
  %54 = vst [vmem:[%s52] sm:$0x1] %v53
  %s55 = scalar_lea.vmem %s0, 352
  %v56 = vld [vmem:[%s55] sm:$0x3]
  %s57 = scalar_lea.vmem %s1, 176
  %v58 = vpack.c.bf16 0.0, %v56
  %59 = vst [vmem:[%s57] sm:$0x1] %v58
  %s60 = scalar_lea.vmem %s0, 384
  %v61 = vld [vmem:[%s60] sm:$0x3]
  %s62 = scalar_lea.vmem %s1, 192
  %v63 = vpack.c.bf16 0.0, %v61
  %64 = vst [vmem:[%s62] sm:$0x1] %v63
  %s65 = scalar_lea.vmem %s0, 416
  %v66 = vld [vmem:[%s65] sm:$0x3]
  %s67 = scalar_lea.vmem %s1, 208
  %v68 = vpack.c.bf16 0.0, %v66
  %69 = vst [vmem:[%s67] sm:$0x1] %v68
  %s70 = scalar_lea.vmem %s0, 448
  %v71 = vld [vmem:[%s70] sm:$0x3]
  %s72 = scalar_lea.vmem %s1, 224
  %v73 = vpack.c.bf16 0.0, %v71
  %74 = vst [vmem:[%s72] sm:$0x1] %v73
  %s75 = scalar_lea.vmem %s0, 480
  %v76 = vld [vmem:[%s75] sm:$0x3]
  %s77 = scalar_lea.vmem %s1, 240
  %v78 = vpack.c.bf16 0.0, %v76
  %79 = vst [vmem:[%s77] sm:$0x1] %v78
  %s80 = scalar_lea.vmem %s0, 2
  %v81 = vld [vmem:[%s80] sm:$0x3]
  %s82 = scalar_lea.vmem %s1, 1
  %v83 = vpack.c.bf16 0.0, %v81
  %84 = vst [vmem:[%s82] sm:$0x1] %v83
  %s85 = scalar_lea.vmem %s0, 34
  %v86 = vld [vmem:[%s85] sm:$0x3]
  %s87 = scalar_lea.vmem %s1, 17
  %v88 = vpack.c.bf16 0.0, %v86
  %89 = vst [vmem:[%s87] sm:$0x1] %v88
  %s90 = scalar_lea.vmem %s0, 66
  %v91 = vld [vmem:[%s90] sm:$0x3]
  %s92 = scalar_lea.vmem %s1, 33
  %v93 = vpack.c.bf16 0.0, %v91
  %94 = vst [vmem:[%s92] sm:$0x1] %v93
  %s95 = scalar_lea.vmem %s0, 98
  %v96 = vld [vmem:[%s95] sm:$0x3]
  %s97 = scalar_lea.vmem %s1, 49
  %v98 = vpack.c.bf16 0.0, %v96
  %99 = vst [vmem:[%s97] sm:$0x1] %v98
  %s100 = scalar_lea.vmem %s0, 130
  %v101 = vld [vmem:[%s100] sm:$0x3]
  %s102 = scalar_lea.vmem %s1, 65
  %v103 = vpack.c.bf16 0.0, %v101
  %104 = vst [vmem:[%s102] sm:$0x1] %v103
  %s105 = scalar_lea.vmem %s0, 162
  %v106 = vld [vmem:[%s105] sm:$0x3]
  %s107 = scalar_lea.vmem %s1, 81
  %v108 = vpack.c.bf16 0.0, %v106
  %109 = vst [vmem:[%s107] sm:$0x1] %v108
  %s110 = scalar_lea.vmem %s0, 194
  %v111 = vld [vmem:[%s110] sm:$0x3]
  %s112 = scalar_lea.vmem %s1, 97
  %v113 = vpack.c.bf16 0.0, %v111
  %114 = vst [vmem:[%s112] sm:$0x1] %v113
  %s115 = scalar_lea.vmem %s0, 226
  %v116 = vld [vmem:[%s115] sm:$0x3]
  %s117 = scalar_lea.vmem %s1, 113
  %v118 = vpack.c.bf16 0.0, %v116
  %119 = vst [vmem:[%s117] sm:$0x1] %v118
  %s120 = scalar_lea.vmem %s0, 258
  %v121 = vld [vmem:[%s120] sm:$0x3]
  %s122 = scalar_lea.vmem %s1, 129
  %v123 = vpack.c.bf16 0.0, %v121
  %124 = vst [vmem:[%s122] sm:$0x1] %v123
  %s125 = scalar_lea.vmem %s0, 290
  %v126 = vld [vmem:[%s125] sm:$0x3]
  %s127 = scalar_lea.vmem %s1, 145
  %v128 = vpack.c.bf16 0.0, %v126
  %129 = vst [vmem:[%s127] sm:$0x1] %v128
  %s130 = scalar_lea.vmem %s0, 322
  %v131 = vld [vmem:[%s130] sm:$0x3]
  %s132 = scalar_lea.vmem %s1, 161
  %v133 = vpack.c.bf16 0.0, %v131
  %134 = vst [vmem:[%s132] sm:$0x1] %v133
  %s135 = scalar_lea.vmem %s0, 354
  %v136 = vld [vmem:[%s135] sm:$0x3]
  %s137 = scalar_lea.vmem %s1, 177
  %v138 = vpack.c.bf16 0.0, %v136
  %139 = vst [vmem:[%s137] sm:$0x1] %v138
  %s140 = scalar_lea.vmem %s0, 386
  %v141 = vld [vmem:[%s140] sm:$0x3]
  %s142 = scalar_lea.vmem %s1, 193
  %v143 = vpack.c.bf16 0.0, %v141
  %144 = vst [vmem:[%s142] sm:$0x1] %v143
  %s145 = scalar_lea.vmem %s0, 418
  %v146 = vld [vmem:[%s145] sm:$0x3]
  %s147 = scalar_lea.vmem %s1, 209
  %v148 = vpack.c.bf16 0.0, %v146
  %149 = vst [vmem:[%s147] sm:$0x1] %v148
  %s150 = scalar_lea.vmem %s0, 450
  %v151 = vld [vmem:[%s150] sm:$0x3]
  %s152 = scalar_lea.vmem %s1, 225
  %v153 = vpack.c.bf16 0.0, %v151
  %154 = vst [vmem:[%s152] sm:$0x1] %v153
  %s155 = scalar_lea.vmem %s0, 482
  %v156 = vld [vmem:[%s155] sm:$0x3]
  %s157 = scalar_lea.vmem %s1, 241
  %v158 = vpack.c.bf16 0.0, %v156
  %159 = vst [vmem:[%s157] sm:$0x1] %v158
  %s160 = scalar_lea.vmem %s0, 4
  %v161 = vld [vmem:[%s160] sm:$0x3]
  %s162 = scalar_lea.vmem %s1, 2
  %v163 = vpack.c.bf16 0.0, %v161
  %164 = vst [vmem:[%s162] sm:$0x1] %v163
  %s165 = scalar_lea.vmem %s0, 36
  %v166 = vld [vmem:[%s165] sm:$0x3]
  %s167 = scalar_lea.vmem %s1, 18
  %v168 = vpack.c.bf16 0.0, %v166
  %169 = vst [vmem:[%s167] sm:$0x1] %v168
  %s170 = scalar_lea.vmem %s0, 68
  %v171 = vld [vmem:[%s170] sm:$0x3]
  %s172 = scalar_lea.vmem %s1, 34
  %v173 = vpack.c.bf16 0.0, %v171
  %174 = vst [vmem:[%s172] sm:$0x1] %v173
  %s175 = scalar_lea.vmem %s0, 100
  %v176 = vld [vmem:[%s175] sm:$0x3]
  %s177 = scalar_lea.vmem %s1, 50
  %v178 = vpack.c.bf16 0.0, %v176
  %179 = vst [vmem:[%s177] sm:$0x1] %v178
  %s180 = scalar_lea.vmem %s0, 132
  %v181 = vld [vmem:[%s180] sm:$0x3]
  %s182 = scalar_lea.vmem %s1, 66
  %v183 = vpack.c.bf16 0.0, %v181
  %184 = vst [vmem:[%s182] sm:$0x1] %v183
  %s185 = scalar_lea.vmem %s0, 164
  %v186 = vld [vmem:[%s185] sm:$0x3]
  %s187 = scalar_lea.vmem %s1, 82
  %v188 = vpack.c.bf16 0.0, %v186
  %189 = vst [vmem:[%s187] sm:$0x1] %v188
  %s190 = scalar_lea.vmem %s0, 196
  %v191 = vld [vmem:[%s190] sm:$0x3]
  %s192 = scalar_lea.vmem %s1, 98
  %v193 = vpack.c.bf16 0.0, %v191
  %194 = vst [vmem:[%s192] sm:$0x1] %v193
  %s195 = scalar_lea.vmem %s0, 228
  %v196 = vld [vmem:[%s195] sm:$0x3]
  %s197 = scalar_lea.vmem %s1, 114
  %v198 = vpack.c.bf16 0.0, %v196
  %199 = vst [vmem:[%s197] sm:$0x1] %v198
  %s200 = scalar_lea.vmem %s0, 260
  %v201 = vld [vmem:[%s200] sm:$0x3]
  %s202 = scalar_lea.vmem %s1, 130
  %v203 = vpack.c.bf16 0.0, %v201
  %204 = vst [vmem:[%s202] sm:$0x1] %v203
  %s205 = scalar_lea.vmem %s0, 292
  %v206 = vld [vmem:[%s205] sm:$0x3]
  %s207 = scalar_lea.vmem %s1, 146
  %v208 = vpack.c.bf16 0.0, %v206
  %209 = vst [vmem:[%s207] sm:$0x1] %v208
  %s210 = scalar_lea.vmem %s0, 324
  %v211 = vld [vmem:[%s210] sm:$0x3]
  %s212 = scalar_lea.vmem %s1, 162
  %v213 = vpack.c.bf16 0.0, %v211
  %214 = vst [vmem:[%s212] sm:$0x1] %v213
  %s215 = scalar_lea.vmem %s0, 356
  %v216 = vld [vmem:[%s215] sm:$0x3]
  %s217 = scalar_lea.vmem %s1, 178
  %v218 = vpack.c.bf16 0.0, %v216
  %219 = vst [vmem:[%s217] sm:$0x1] %v218
  %s220 = scalar_lea.vmem %s0, 388
  %v221 = vld [vmem:[%s220] sm:$0x3]
  %s222 = scalar_lea.vmem %s1, 194
  %v223 = vpack.c.bf16 0.0, %v221
  %224 = vst [vmem:[%s222] sm:$0x1] %v223
  %s225 = scalar_lea.vmem %s0, 420
  %v226 = vld [vmem:[%s225] sm:$0x3]
  %s227 = scalar_lea.vmem %s1, 210
  %v228 = vpack.c.bf16 0.0, %v226
  %229 = vst [vmem:[%s227] sm:$0x1] %v228
  %s230 = scalar_lea.vmem %s0, 452
  %v231 = vld [vmem:[%s230] sm:$0x3]
  %s232 = scalar_lea.vmem %s1, 226
  %v233 = vpack.c.bf16 0.0, %v231
  %234 = vst [vmem:[%s232] sm:$0x1] %v233
  %s235 = scalar_lea.vmem %s0, 484
  %v236 = vld [vmem:[%s235] sm:$0x3]
  %s237 = scalar_lea.vmem %s1, 242
  %v238 = vpack.c.bf16 0.0, %v236
  %239 = vst [vmem:[%s237] sm:$0x1] %v238
  %s240 = scalar_lea.vmem %s0, 6
  %v241 = vld [vmem:[%s240] sm:$0x3]
  %s242 = scalar_lea.vmem %s1, 3
  %v243 = vpack.c.bf16 0.0, %v241
  %244 = vst [vmem:[%s242] sm:$0x1] %v243
  %s245 = scalar_lea.vmem %s0, 38
  %v246 = vld [vmem:[%s245] sm:$0x3]
  %s247 = scalar_lea.vmem %s1, 19
  %v248 = vpack.c.bf16 0.0, %v246
  %249 = vst [vmem:[%s247] sm:$0x1] %v248
  %s250 = scalar_lea.vmem %s0, 70
  %v251 = vld [vmem:[%s250] sm:$0x3]
  %s252 = scalar_lea.vmem %s1, 35
  %v253 = vpack.c.bf16 0.0, %v251
  %254 = vst [vmem:[%s252] sm:$0x1] %v253
  %s255 = scalar_lea.vmem %s0, 102
  %v256 = vld [vmem:[%s255] sm:$0x3]
  %s257 = scalar_lea.vmem %s1, 51
  %v258 = vpack.c.bf16 0.0, %v256
  %259 = vst [vmem:[%s257] sm:$0x1] %v258
  %s260 = scalar_lea.vmem %s0, 134
  %v261 = vld [vmem:[%s260] sm:$0x3]
  %s262 = scalar_lea.vmem %s1, 67
  %v263 = vpack.c.bf16 0.0, %v261
  %264 = vst [vmem:[%s262] sm:$0x1] %v263
  %s265 = scalar_lea.vmem %s0, 166
  %v266 = vld [vmem:[%s265] sm:$0x3]
  %s267 = scalar_lea.vmem %s1, 83
  %v268 = vpack.c.bf16 0.0, %v266
  %269 = vst [vmem:[%s267] sm:$0x1] %v268
  %s270 = scalar_lea.vmem %s0, 198
  %v271 = vld [vmem:[%s270] sm:$0x3]
  %s272 = scalar_lea.vmem %s1, 99
  %v273 = vpack.c.bf16 0.0, %v271
  %274 = vst [vmem:[%s272] sm:$0x1] %v273
  %s275 = scalar_lea.vmem %s0, 230
  %v276 = vld [vmem:[%s275] sm:$0x3]
  %s277 = scalar_lea.vmem %s1, 115
  %v278 = vpack.c.bf16 0.0, %v276
  %279 = vst [vmem:[%s277] sm:$0x1] %v278
  %s280 = scalar_lea.vmem %s0, 262
  %v281 = vld [vmem:[%s280] sm:$0x3]
  %s282 = scalar_lea.vmem %s1, 131
  %v283 = vpack.c.bf16 0.0, %v281
  %284 = vst [vmem:[%s282] sm:$0x1] %v283
  %s285 = scalar_lea.vmem %s0, 294
  %v286 = vld [vmem:[%s285] sm:$0x3]
  %s287 = scalar_lea.vmem %s1, 147
  %v288 = vpack.c.bf16 0.0, %v286
  %289 = vst [vmem:[%s287] sm:$0x1] %v288
  %s290 = scalar_lea.vmem %s0, 326
  %v291 = vld [vmem:[%s290] sm:$0x3]
  %s292 = scalar_lea.vmem %s1, 163
  %v293 = vpack.c.bf16 0.0, %v291
  %294 = vst [vmem:[%s292] sm:$0x1] %v293
  %s295 = scalar_lea.vmem %s0, 358
  %v296 = vld [vmem:[%s295] sm:$0x3]
  %s297 = scalar_lea.vmem %s1, 179
  %v298 = vpack.c.bf16 0.0, %v296
  %299 = vst [vmem:[%s297] sm:$0x1] %v298
  %s300 = scalar_lea.vmem %s0, 390
  %v301 = vld [vmem:[%s300] sm:$0x3]
  %s302 = scalar_lea.vmem %s1, 195
  %v303 = vpack.c.bf16 0.0, %v301
  %304 = vst [vmem:[%s302] sm:$0x1] %v303
  %s305 = scalar_lea.vmem %s0, 422
  %v306 = vld [vmem:[%s305] sm:$0x3]
  %s307 = scalar_lea.vmem %s1, 211
  %v308 = vpack.c.bf16 0.0, %v306
  %309 = vst [vmem:[%s307] sm:$0x1] %v308
  %s310 = scalar_lea.vmem %s0, 454
  %v311 = vld [vmem:[%s310] sm:$0x3]
  %s312 = scalar_lea.vmem %s1, 227
  %v313 = vpack.c.bf16 0.0, %v311
  %314 = vst [vmem:[%s312] sm:$0x1] %v313
  %s315 = scalar_lea.vmem %s0, 486
  %v316 = vld [vmem:[%s315] sm:$0x3]
  %s317 = scalar_lea.vmem %s1, 243
  %v318 = vpack.c.bf16 0.0, %v316
  %319 = vst [vmem:[%s317] sm:$0x1] %v318
  %s320 = scalar_lea.vmem %s0, 8
  %v321 = vld [vmem:[%s320] sm:$0x3]
  %s322 = scalar_lea.vmem %s1, 4
  %v323 = vpack.c.bf16 0.0, %v321
  %324 = vst [vmem:[%s322] sm:$0x1] %v323
  %s325 = scalar_lea.vmem %s0, 40
  %v326 = vld [vmem:[%s325] sm:$0x3]
  %s327 = scalar_lea.vmem %s1, 20
  %v328 = vpack.c.bf16 0.0, %v326
  %329 = vst [vmem:[%s327] sm:$0x1] %v328
  %s330 = scalar_lea.vmem %s0, 72
  %v331 = vld [vmem:[%s330] sm:$0x3]
  %s332 = scalar_lea.vmem %s1, 36
  %v333 = vpack.c.bf16 0.0, %v331
  %334 = vst [vmem:[%s332] sm:$0x1] %v333
  %s335 = scalar_lea.vmem %s0, 104
  %v336 = vld [vmem:[%s335] sm:$0x3]
  %s337 = scalar_lea.vmem %s1, 52
  %v338 = vpack.c.bf16 0.0, %v336
  %339 = vst [vmem:[%s337] sm:$0x1] %v338
  %s340 = scalar_lea.vmem %s0, 136
  %v341 = vld [vmem:[%s340] sm:$0x3]
  %s342 = scalar_lea.vmem %s1, 68
  %v343 = vpack.c.bf16 0.0, %v341
  %344 = vst [vmem:[%s342] sm:$0x1] %v343
  %s345 = scalar_lea.vmem %s0, 168
  %v346 = vld [vmem:[%s345] sm:$0x3]
  %s347 = scalar_lea.vmem %s1, 84
  %v348 = vpack.c.bf16 0.0, %v346
  %349 = vst [vmem:[%s347] sm:$0x1] %v348
  %s350 = scalar_lea.vmem %s0, 200
  %v351 = vld [vmem:[%s350] sm:$0x3]
  %s352 = scalar_lea.vmem %s1, 100
  %v353 = vpack.c.bf16 0.0, %v351
  %354 = vst [vmem:[%s352] sm:$0x1] %v353
  %s355 = scalar_lea.vmem %s0, 232
  %v356 = vld [vmem:[%s355] sm:$0x3]
  %s357 = scalar_lea.vmem %s1, 116
  %v358 = vpack.c.bf16 0.0, %v356
  %359 = vst [vmem:[%s357] sm:$0x1] %v358
  %s360 = scalar_lea.vmem %s0, 264
  %v361 = vld [vmem:[%s360] sm:$0x3]
  %s362 = scalar_lea.vmem %s1, 132
  %v363 = vpack.c.bf16 0.0, %v361
  %364 = vst [vmem:[%s362] sm:$0x1] %v363
  %s365 = scalar_lea.vmem %s0, 296
  %v366 = vld [vmem:[%s365] sm:$0x3]
  %s367 = scalar_lea.vmem %s1, 148
  %v368 = vpack.c.bf16 0.0, %v366
  %369 = vst [vmem:[%s367] sm:$0x1] %v368
  %s370 = scalar_lea.vmem %s0, 328
  %v371 = vld [vmem:[%s370] sm:$0x3]
  %s372 = scalar_lea.vmem %s1, 164
  %v373 = vpack.c.bf16 0.0, %v371
  %374 = vst [vmem:[%s372] sm:$0x1] %v373
  %s375 = scalar_lea.vmem %s0, 360
  %v376 = vld [vmem:[%s375] sm:$0x3]
  %s377 = scalar_lea.vmem %s1, 180
  %v378 = vpack.c.bf16 0.0, %v376
  %379 = vst [vmem:[%s377] sm:$0x1] %v378
  %s380 = scalar_lea.vmem %s0, 392
  %v381 = vld [vmem:[%s380] sm:$0x3]
  %s382 = scalar_lea.vmem %s1, 196
  %v383 = vpack.c.bf16 0.0, %v381
  %384 = vst [vmem:[%s382] sm:$0x1] %v383
  %s385 = scalar_lea.vmem %s0, 424
  %v386 = vld [vmem:[%s385] sm:$0x3]
  %s387 = scalar_lea.vmem %s1, 212
  %v388 = vpack.c.bf16 0.0, %v386
  %389 = vst [vmem:[%s387] sm:$0x1] %v388
  %s390 = scalar_lea.vmem %s0, 456
  %v391 = vld [vmem:[%s390] sm:$0x3]
  %s392 = scalar_lea.vmem %s1, 228
  %v393 = vpack.c.bf16 0.0, %v391
  %394 = vst [vmem:[%s392] sm:$0x1] %v393
  %s395 = scalar_lea.vmem %s0, 488
  %v396 = vld [vmem:[%s395] sm:$0x3]
  %s397 = scalar_lea.vmem %s1, 244
  %v398 = vpack.c.bf16 0.0, %v396
  %399 = vst [vmem:[%s397] sm:$0x1] %v398
  %s400 = scalar_lea.vmem %s0, 10
  %v401 = vld [vmem:[%s400] sm:$0x3]
  %s402 = scalar_lea.vmem %s1, 5
  %v403 = vpack.c.bf16 0.0, %v401
  %404 = vst [vmem:[%s402] sm:$0x1] %v403
  %s405 = scalar_lea.vmem %s0, 42
  %v406 = vld [vmem:[%s405] sm:$0x3]
  %s407 = scalar_lea.vmem %s1, 21
  %v408 = vpack.c.bf16 0.0, %v406
  %409 = vst [vmem:[%s407] sm:$0x1] %v408
  %s410 = scalar_lea.vmem %s0, 74
  %v411 = vld [vmem:[%s410] sm:$0x3]
  %s412 = scalar_lea.vmem %s1, 37
  %v413 = vpack.c.bf16 0.0, %v411
  %414 = vst [vmem:[%s412] sm:$0x1] %v413
  %s415 = scalar_lea.vmem %s0, 106
  %v416 = vld [vmem:[%s415] sm:$0x3]
  %s417 = scalar_lea.vmem %s1, 53
  %v418 = vpack.c.bf16 0.0, %v416
  %419 = vst [vmem:[%s417] sm:$0x1] %v418
  %s420 = scalar_lea.vmem %s0, 138
  %v421 = vld [vmem:[%s420] sm:$0x3]
  %s422 = scalar_lea.vmem %s1, 69
  %v423 = vpack.c.bf16 0.0, %v421
  %424 = vst [vmem:[%s422] sm:$0x1] %v423
  %s425 = scalar_lea.vmem %s0, 170
  %v426 = vld [vmem:[%s425] sm:$0x3]
  %s427 = scalar_lea.vmem %s1, 85
  %v428 = vpack.c.bf16 0.0, %v426
  %429 = vst [vmem:[%s427] sm:$0x1] %v428
  %s430 = scalar_lea.vmem %s0, 202
  %v431 = vld [vmem:[%s430] sm:$0x3]
  %s432 = scalar_lea.vmem %s1, 101
  %v433 = vpack.c.bf16 0.0, %v431
  %434 = vst [vmem:[%s432] sm:$0x1] %v433
  %s435 = scalar_lea.vmem %s0, 234
  %v436 = vld [vmem:[%s435] sm:$0x3]
  %s437 = scalar_lea.vmem %s1, 117
  %v438 = vpack.c.bf16 0.0, %v436
  %439 = vst [vmem:[%s437] sm:$0x1] %v438
  %s440 = scalar_lea.vmem %s0, 266
  %v441 = vld [vmem:[%s440] sm:$0x3]
  %s442 = scalar_lea.vmem %s1, 133
  %v443 = vpack.c.bf16 0.0, %v441
  %444 = vst [vmem:[%s442] sm:$0x1] %v443
  %s445 = scalar_lea.vmem %s0, 298
  %v446 = vld [vmem:[%s445] sm:$0x3]
  %s447 = scalar_lea.vmem %s1, 149
  %v448 = vpack.c.bf16 0.0, %v446
  %449 = vst [vmem:[%s447] sm:$0x1] %v448
  %s450 = scalar_lea.vmem %s0, 330
  %v451 = vld [vmem:[%s450] sm:$0x3]
  %s452 = scalar_lea.vmem %s1, 165
  %v453 = vpack.c.bf16 0.0, %v451
  %454 = vst [vmem:[%s452] sm:$0x1] %v453
  %s455 = scalar_lea.vmem %s0, 362
  %v456 = vld [vmem:[%s455] sm:$0x3]
  %s457 = scalar_lea.vmem %s1, 181
  %v458 = vpack.c.bf16 0.0, %v456
  %459 = vst [vmem:[%s457] sm:$0x1] %v458
  %s460 = scalar_lea.vmem %s0, 394
  %v461 = vld [vmem:[%s460] sm:$0x3]
  %s462 = scalar_lea.vmem %s1, 197
  %v463 = vpack.c.bf16 0.0, %v461
  %464 = vst [vmem:[%s462] sm:$0x1] %v463
  %s465 = scalar_lea.vmem %s0, 426
  %v466 = vld [vmem:[%s465] sm:$0x3]
  %s467 = scalar_lea.vmem %s1, 213
  %v468 = vpack.c.bf16 0.0, %v466
  %469 = vst [vmem:[%s467] sm:$0x1] %v468
  %s470 = scalar_lea.vmem %s0, 458
  %v471 = vld [vmem:[%s470] sm:$0x3]
  %s472 = scalar_lea.vmem %s1, 229
  %v473 = vpack.c.bf16 0.0, %v471
  %474 = vst [vmem:[%s472] sm:$0x1] %v473
  %s475 = scalar_lea.vmem %s0, 490
  %v476 = vld [vmem:[%s475] sm:$0x3]
  %s477 = scalar_lea.vmem %s1, 245
  %v478 = vpack.c.bf16 0.0, %v476
  %479 = vst [vmem:[%s477] sm:$0x1] %v478
  %s480 = scalar_lea.vmem %s0, 12
  %v481 = vld [vmem:[%s480] sm:$0x3]
  %s482 = scalar_lea.vmem %s1, 6
  %v483 = vpack.c.bf16 0.0, %v481
  %484 = vst [vmem:[%s482] sm:$0x1] %v483
  %s485 = scalar_lea.vmem %s0, 44
  %v486 = vld [vmem:[%s485] sm:$0x3]
  %s487 = scalar_lea.vmem %s1, 22
  %v488 = vpack.c.bf16 0.0, %v486
  %489 = vst [vmem:[%s487] sm:$0x1] %v488
  %s490 = scalar_lea.vmem %s0, 76
  %v491 = vld [vmem:[%s490] sm:$0x3]
  %s492 = scalar_lea.vmem %s1, 38
  %v493 = vpack.c.bf16 0.0, %v491
  %494 = vst [vmem:[%s492] sm:$0x1] %v493
  %s495 = scalar_lea.vmem %s0, 108
  %v496 = vld [vmem:[%s495] sm:$0x3]
  %s497 = scalar_lea.vmem %s1, 54
  %v498 = vpack.c.bf16 0.0, %v496
  %499 = vst [vmem:[%s497] sm:$0x1] %v498
  %s500 = scalar_lea.vmem %s0, 140
  %v501 = vld [vmem:[%s500] sm:$0x3]
  %s502 = scalar_lea.vmem %s1, 70
  %v503 = vpack.c.bf16 0.0, %v501
  %504 = vst [vmem:[%s502] sm:$0x1] %v503
  %s505 = scalar_lea.vmem %s0, 172
  %v506 = vld [vmem:[%s505] sm:$0x3]
  %s507 = scalar_lea.vmem %s1, 86
  %v508 = vpack.c.bf16 0.0, %v506
  %509 = vst [vmem:[%s507] sm:$0x1] %v508
  %s510 = scalar_lea.vmem %s0, 204
  %v511 = vld [vmem:[%s510] sm:$0x3]
  %s512 = scalar_lea.vmem %s1, 102
  %v513 = vpack.c.bf16 0.0, %v511
  %514 = vst [vmem:[%s512] sm:$0x1] %v513
  %s515 = scalar_lea.vmem %s0, 236
  %v516 = vld [vmem:[%s515] sm:$0x3]
  %s517 = scalar_lea.vmem %s1, 118
  %v518 = vpack.c.bf16 0.0, %v516
  %519 = vst [vmem:[%s517] sm:$0x1] %v518
  %s520 = scalar_lea.vmem %s0, 268
  %v521 = vld [vmem:[%s520] sm:$0x3]
  %s522 = scalar_lea.vmem %s1, 134
  %v523 = vpack.c.bf16 0.0, %v521
  %524 = vst [vmem:[%s522] sm:$0x1] %v523
  %s525 = scalar_lea.vmem %s0, 300
  %v526 = vld [vmem:[%s525] sm:$0x3]
  %s527 = scalar_lea.vmem %s1, 150
  %v528 = vpack.c.bf16 0.0, %v526
  %529 = vst [vmem:[%s527] sm:$0x1] %v528
  %s530 = scalar_lea.vmem %s0, 332
  %v531 = vld [vmem:[%s530] sm:$0x3]
  %s532 = scalar_lea.vmem %s1, 166
  %v533 = vpack.c.bf16 0.0, %v531
  %534 = vst [vmem:[%s532] sm:$0x1] %v533
  %s535 = scalar_lea.vmem %s0, 364
  %v536 = vld [vmem:[%s535] sm:$0x3]
  %s537 = scalar_lea.vmem %s1, 182
  %v538 = vpack.c.bf16 0.0, %v536
  %539 = vst [vmem:[%s537] sm:$0x1] %v538
  %s540 = scalar_lea.vmem %s0, 396
  %v541 = vld [vmem:[%s540] sm:$0x3]
  %s542 = scalar_lea.vmem %s1, 198
  %v543 = vpack.c.bf16 0.0, %v541
  %544 = vst [vmem:[%s542] sm:$0x1] %v543
  %s545 = scalar_lea.vmem %s0, 428
  %v546 = vld [vmem:[%s545] sm:$0x3]
  %s547 = scalar_lea.vmem %s1, 214
  %v548 = vpack.c.bf16 0.0, %v546
  %549 = vst [vmem:[%s547] sm:$0x1] %v548
  %s550 = scalar_lea.vmem %s0, 460
  %v551 = vld [vmem:[%s550] sm:$0x3]
  %s552 = scalar_lea.vmem %s1, 230
  %v553 = vpack.c.bf16 0.0, %v551
  %554 = vst [vmem:[%s552] sm:$0x1] %v553
  %s555 = scalar_lea.vmem %s0, 492
  %v556 = vld [vmem:[%s555] sm:$0x3]
  %s557 = scalar_lea.vmem %s1, 246
  %v558 = vpack.c.bf16 0.0, %v556
  %559 = vst [vmem:[%s557] sm:$0x1] %v558
  %s560 = scalar_lea.vmem %s0, 14
  %v561 = vld [vmem:[%s560] sm:$0x3]
  %s562 = scalar_lea.vmem %s1, 7
  %v563 = vpack.c.bf16 0.0, %v561
  %564 = vst [vmem:[%s562] sm:$0x1] %v563
  %s565 = scalar_lea.vmem %s0, 46
  %v566 = vld [vmem:[%s565] sm:$0x3]
  %s567 = scalar_lea.vmem %s1, 23
  %v568 = vpack.c.bf16 0.0, %v566
  %569 = vst [vmem:[%s567] sm:$0x1] %v568
  %s570 = scalar_lea.vmem %s0, 78
  %v571 = vld [vmem:[%s570] sm:$0x3]
  %s572 = scalar_lea.vmem %s1, 39
  %v573 = vpack.c.bf16 0.0, %v571
  %574 = vst [vmem:[%s572] sm:$0x1] %v573
  %s575 = scalar_lea.vmem %s0, 110
  %v576 = vld [vmem:[%s575] sm:$0x3]
  %s577 = scalar_lea.vmem %s1, 55
  %v578 = vpack.c.bf16 0.0, %v576
  %579 = vst [vmem:[%s577] sm:$0x1] %v578
  %s580 = scalar_lea.vmem %s0, 142
  %v581 = vld [vmem:[%s580] sm:$0x3]
  %s582 = scalar_lea.vmem %s1, 71
  %v583 = vpack.c.bf16 0.0, %v581
  %584 = vst [vmem:[%s582] sm:$0x1] %v583
  %s585 = scalar_lea.vmem %s0, 174
  %v586 = vld [vmem:[%s585] sm:$0x3]
  %s587 = scalar_lea.vmem %s1, 87
  %v588 = vpack.c.bf16 0.0, %v586
  %589 = vst [vmem:[%s587] sm:$0x1] %v588
  %s590 = scalar_lea.vmem %s0, 206
  %v591 = vld [vmem:[%s590] sm:$0x3]
  %s592 = scalar_lea.vmem %s1, 103
  %v593 = vpack.c.bf16 0.0, %v591
  %594 = vst [vmem:[%s592] sm:$0x1] %v593
  %s595 = scalar_lea.vmem %s0, 238
  %v596 = vld [vmem:[%s595] sm:$0x3]
  %s597 = scalar_lea.vmem %s1, 119
  %v598 = vpack.c.bf16 0.0, %v596
  %599 = vst [vmem:[%s597] sm:$0x1] %v598
  %s600 = scalar_lea.vmem %s0, 270
  %v601 = vld [vmem:[%s600] sm:$0x3]
  %s602 = scalar_lea.vmem %s1, 135
  %v603 = vpack.c.bf16 0.0, %v601
  %604 = vst [vmem:[%s602] sm:$0x1] %v603
  %s605 = scalar_lea.vmem %s0, 302
  %v606 = vld [vmem:[%s605] sm:$0x3]
  %s607 = scalar_lea.vmem %s1, 151
  %v608 = vpack.c.bf16 0.0, %v606
  %609 = vst [vmem:[%s607] sm:$0x1] %v608
  %s610 = scalar_lea.vmem %s0, 334
  %v611 = vld [vmem:[%s610] sm:$0x3]
  %s612 = scalar_lea.vmem %s1, 167
  %v613 = vpack.c.bf16 0.0, %v611
  %614 = vst [vmem:[%s612] sm:$0x1] %v613
  %s615 = scalar_lea.vmem %s0, 366
  %v616 = vld [vmem:[%s615] sm:$0x3]
  %s617 = scalar_lea.vmem %s1, 183
  %v618 = vpack.c.bf16 0.0, %v616
  %619 = vst [vmem:[%s617] sm:$0x1] %v618
  %s620 = scalar_lea.vmem %s0, 398
  %v621 = vld [vmem:[%s620] sm:$0x3]
  %s622 = scalar_lea.vmem %s1, 199
  %v623 = vpack.c.bf16 0.0, %v621
  %624 = vst [vmem:[%s622] sm:$0x1] %v623
  %s625 = scalar_lea.vmem %s0, 430
  %v626 = vld [vmem:[%s625] sm:$0x3]
  %s627 = scalar_lea.vmem %s1, 215
  %v628 = vpack.c.bf16 0.0, %v626
  %629 = vst [vmem:[%s627] sm:$0x1] %v628
  %s630 = scalar_lea.vmem %s0, 462
  %v631 = vld [vmem:[%s630] sm:$0x3]
  %s632 = scalar_lea.vmem %s1, 231
  %v633 = vpack.c.bf16 0.0, %v631
  %634 = vst [vmem:[%s632] sm:$0x1] %v633
  %s635 = scalar_lea.vmem %s0, 494
  %v636 = vld [vmem:[%s635] sm:$0x3]
  %s637 = scalar_lea.vmem %s1, 247
  %v638 = vpack.c.bf16 0.0, %v636
  %639 = vst [vmem:[%s637] sm:$0x1] %v638
  %s640 = scalar_lea.vmem %s0, 16
  %v641 = vld [vmem:[%s640] sm:$0x3]
  %s642 = scalar_lea.vmem %s1, 8
  %v643 = vpack.c.bf16 0.0, %v641
  %644 = vst [vmem:[%s642] sm:$0x1] %v643
  %s645 = scalar_lea.vmem %s0, 48
  %v646 = vld [vmem:[%s645] sm:$0x3]
  %s647 = scalar_lea.vmem %s1, 24
  %v648 = vpack.c.bf16 0.0, %v646
  %649 = vst [vmem:[%s647] sm:$0x1] %v648
  %s650 = scalar_lea.vmem %s0, 80
  %v651 = vld [vmem:[%s650] sm:$0x3]
  %s652 = scalar_lea.vmem %s1, 40
  %v653 = vpack.c.bf16 0.0, %v651
  %654 = vst [vmem:[%s652] sm:$0x1] %v653
  %s655 = scalar_lea.vmem %s0, 112
  %v656 = vld [vmem:[%s655] sm:$0x3]
  %s657 = scalar_lea.vmem %s1, 56
  %v658 = vpack.c.bf16 0.0, %v656
  %659 = vst [vmem:[%s657] sm:$0x1] %v658
  %s660 = scalar_lea.vmem %s0, 144
  %v661 = vld [vmem:[%s660] sm:$0x3]
  %s662 = scalar_lea.vmem %s1, 72
  %v663 = vpack.c.bf16 0.0, %v661
  %664 = vst [vmem:[%s662] sm:$0x1] %v663
  %s665 = scalar_lea.vmem %s0, 176
  %v666 = vld [vmem:[%s665] sm:$0x3]
  %s667 = scalar_lea.vmem %s1, 88
  %v668 = vpack.c.bf16 0.0, %v666
  %669 = vst [vmem:[%s667] sm:$0x1] %v668
  %s670 = scalar_lea.vmem %s0, 208
  %v671 = vld [vmem:[%s670] sm:$0x3]
  %s672 = scalar_lea.vmem %s1, 104
  %v673 = vpack.c.bf16 0.0, %v671
  %674 = vst [vmem:[%s672] sm:$0x1] %v673
  %s675 = scalar_lea.vmem %s0, 240
  %v676 = vld [vmem:[%s675] sm:$0x3]
  %s677 = scalar_lea.vmem %s1, 120
  %v678 = vpack.c.bf16 0.0, %v676
  %679 = vst [vmem:[%s677] sm:$0x1] %v678
  %s680 = scalar_lea.vmem %s0, 272
  %v681 = vld [vmem:[%s680] sm:$0x3]
  %s682 = scalar_lea.vmem %s1, 136
  %v683 = vpack.c.bf16 0.0, %v681
  %684 = vst [vmem:[%s682] sm:$0x1] %v683
  %s685 = scalar_lea.vmem %s0, 304
  %v686 = vld [vmem:[%s685] sm:$0x3]
  %s687 = scalar_lea.vmem %s1, 152
  %v688 = vpack.c.bf16 0.0, %v686
  %689 = vst [vmem:[%s687] sm:$0x1] %v688
  %s690 = scalar_lea.vmem %s0, 336
  %v691 = vld [vmem:[%s690] sm:$0x3]
  %s692 = scalar_lea.vmem %s1, 168
  %v693 = vpack.c.bf16 0.0, %v691
  %694 = vst [vmem:[%s692] sm:$0x1] %v693
  %s695 = scalar_lea.vmem %s0, 368
  %v696 = vld [vmem:[%s695] sm:$0x3]
  %s697 = scalar_lea.vmem %s1, 184
  %v698 = vpack.c.bf16 0.0, %v696
  %699 = vst [vmem:[%s697] sm:$0x1] %v698
  %s700 = scalar_lea.vmem %s0, 400
  %v701 = vld [vmem:[%s700] sm:$0x3]
  %s702 = scalar_lea.vmem %s1, 200
  %v703 = vpack.c.bf16 0.0, %v701
  %704 = vst [vmem:[%s702] sm:$0x1] %v703
  %s705 = scalar_lea.vmem %s0, 432
  %v706 = vld [vmem:[%s705] sm:$0x3]
  %s707 = scalar_lea.vmem %s1, 216
  %v708 = vpack.c.bf16 0.0, %v706
  %709 = vst [vmem:[%s707] sm:$0x1] %v708
  %s710 = scalar_lea.vmem %s0, 464
  %v711 = vld [vmem:[%s710] sm:$0x3]
  %s712 = scalar_lea.vmem %s1, 232
  %v713 = vpack.c.bf16 0.0, %v711
  %714 = vst [vmem:[%s712] sm:$0x1] %v713
  %s715 = scalar_lea.vmem %s0, 496
  %v716 = vld [vmem:[%s715] sm:$0x3]
  %s717 = scalar_lea.vmem %s1, 248
  %v718 = vpack.c.bf16 0.0, %v716
  %719 = vst [vmem:[%s717] sm:$0x1] %v718
  %s720 = scalar_lea.vmem %s0, 18
  %v721 = vld [vmem:[%s720] sm:$0x3]
  %s722 = scalar_lea.vmem %s1, 9
  %v723 = vpack.c.bf16 0.0, %v721
  %724 = vst [vmem:[%s722] sm:$0x1] %v723
  %s725 = scalar_lea.vmem %s0, 50
  %v726 = vld [vmem:[%s725] sm:$0x3]
  %s727 = scalar_lea.vmem %s1, 25
  %v728 = vpack.c.bf16 0.0, %v726
  %729 = vst [vmem:[%s727] sm:$0x1] %v728
  %s730 = scalar_lea.vmem %s0, 82
  %v731 = vld [vmem:[%s730] sm:$0x3]
  %s732 = scalar_lea.vmem %s1, 41
  %v733 = vpack.c.bf16 0.0, %v731
  %734 = vst [vmem:[%s732] sm:$0x1] %v733
  %s735 = scalar_lea.vmem %s0, 114
  %v736 = vld [vmem:[%s735] sm:$0x3]
  %s737 = scalar_lea.vmem %s1, 57
  %v738 = vpack.c.bf16 0.0, %v736
  %739 = vst [vmem:[%s737] sm:$0x1] %v738
  %s740 = scalar_lea.vmem %s0, 146
  %v741 = vld [vmem:[%s740] sm:$0x3]
  %s742 = scalar_lea.vmem %s1, 73
  %v743 = vpack.c.bf16 0.0, %v741
  %744 = vst [vmem:[%s742] sm:$0x1] %v743
  %s745 = scalar_lea.vmem %s0, 178
  %v746 = vld [vmem:[%s745] sm:$0x3]
  %s747 = scalar_lea.vmem %s1, 89
  %v748 = vpack.c.bf16 0.0, %v746
  %749 = vst [vmem:[%s747] sm:$0x1] %v748
  %s750 = scalar_lea.vmem %s0, 210
  %v751 = vld [vmem:[%s750] sm:$0x3]
  %s752 = scalar_lea.vmem %s1, 105
  %v753 = vpack.c.bf16 0.0, %v751
  %754 = vst [vmem:[%s752] sm:$0x1] %v753
  %s755 = scalar_lea.vmem %s0, 242
  %v756 = vld [vmem:[%s755] sm:$0x3]
  %s757 = scalar_lea.vmem %s1, 121
  %v758 = vpack.c.bf16 0.0, %v756
  %759 = vst [vmem:[%s757] sm:$0x1] %v758
  %s760 = scalar_lea.vmem %s0, 274
  %v761 = vld [vmem:[%s760] sm:$0x3]
  %s762 = scalar_lea.vmem %s1, 137
  %v763 = vpack.c.bf16 0.0, %v761
  %764 = vst [vmem:[%s762] sm:$0x1] %v763
  %s765 = scalar_lea.vmem %s0, 306
  %v766 = vld [vmem:[%s765] sm:$0x3]
  %s767 = scalar_lea.vmem %s1, 153
  %v768 = vpack.c.bf16 0.0, %v766
  %769 = vst [vmem:[%s767] sm:$0x1] %v768
  %s770 = scalar_lea.vmem %s0, 338
  %v771 = vld [vmem:[%s770] sm:$0x3]
  %s772 = scalar_lea.vmem %s1, 169
  %v773 = vpack.c.bf16 0.0, %v771
  %774 = vst [vmem:[%s772] sm:$0x1] %v773
  %s775 = scalar_lea.vmem %s0, 370
  %v776 = vld [vmem:[%s775] sm:$0x3]
  %s777 = scalar_lea.vmem %s1, 185
  %v778 = vpack.c.bf16 0.0, %v776
  %779 = vst [vmem:[%s777] sm:$0x1] %v778
  %s780 = scalar_lea.vmem %s0, 402
  %v781 = vld [vmem:[%s780] sm:$0x3]
  %s782 = scalar_lea.vmem %s1, 201
  %v783 = vpack.c.bf16 0.0, %v781
  %784 = vst [vmem:[%s782] sm:$0x1] %v783
  %s785 = scalar_lea.vmem %s0, 434
  %v786 = vld [vmem:[%s785] sm:$0x3]
  %s787 = scalar_lea.vmem %s1, 217
  %v788 = vpack.c.bf16 0.0, %v786
  %789 = vst [vmem:[%s787] sm:$0x1] %v788
  %s790 = scalar_lea.vmem %s0, 466
  %v791 = vld [vmem:[%s790] sm:$0x3]
  %s792 = scalar_lea.vmem %s1, 233
  %v793 = vpack.c.bf16 0.0, %v791
  %794 = vst [vmem:[%s792] sm:$0x1] %v793
  %s795 = scalar_lea.vmem %s0, 498
  %v796 = vld [vmem:[%s795] sm:$0x3]
  %s797 = scalar_lea.vmem %s1, 249
  %v798 = vpack.c.bf16 0.0, %v796
  %799 = vst [vmem:[%s797] sm:$0x1] %v798
  %s800 = scalar_lea.vmem %s0, 20
  %v801 = vld [vmem:[%s800] sm:$0x3]
  %s802 = scalar_lea.vmem %s1, 10
  %v803 = vpack.c.bf16 0.0, %v801
  %804 = vst [vmem:[%s802] sm:$0x1] %v803
  %s805 = scalar_lea.vmem %s0, 52
  %v806 = vld [vmem:[%s805] sm:$0x3]
  %s807 = scalar_lea.vmem %s1, 26
  %v808 = vpack.c.bf16 0.0, %v806
  %809 = vst [vmem:[%s807] sm:$0x1] %v808
  %s810 = scalar_lea.vmem %s0, 84
  %v811 = vld [vmem:[%s810] sm:$0x3]
  %s812 = scalar_lea.vmem %s1, 42
  %v813 = vpack.c.bf16 0.0, %v811
  %814 = vst [vmem:[%s812] sm:$0x1] %v813
  %s815 = scalar_lea.vmem %s0, 116
  %v816 = vld [vmem:[%s815] sm:$0x3]
  %s817 = scalar_lea.vmem %s1, 58
  %v818 = vpack.c.bf16 0.0, %v816
  %819 = vst [vmem:[%s817] sm:$0x1] %v818
  %s820 = scalar_lea.vmem %s0, 148
  %v821 = vld [vmem:[%s820] sm:$0x3]
  %s822 = scalar_lea.vmem %s1, 74
  %v823 = vpack.c.bf16 0.0, %v821
  %824 = vst [vmem:[%s822] sm:$0x1] %v823
  %s825 = scalar_lea.vmem %s0, 180
  %v826 = vld [vmem:[%s825] sm:$0x3]
  %s827 = scalar_lea.vmem %s1, 90
  %v828 = vpack.c.bf16 0.0, %v826
  %829 = vst [vmem:[%s827] sm:$0x1] %v828
  %s830 = scalar_lea.vmem %s0, 212
  %v831 = vld [vmem:[%s830] sm:$0x3]
  %s832 = scalar_lea.vmem %s1, 106
  %v833 = vpack.c.bf16 0.0, %v831
  %834 = vst [vmem:[%s832] sm:$0x1] %v833
  %s835 = scalar_lea.vmem %s0, 244
  %v836 = vld [vmem:[%s835] sm:$0x3]
  %s837 = scalar_lea.vmem %s1, 122
  %v838 = vpack.c.bf16 0.0, %v836
  %839 = vst [vmem:[%s837] sm:$0x1] %v838
  %s840 = scalar_lea.vmem %s0, 276
  %v841 = vld [vmem:[%s840] sm:$0x3]
  %s842 = scalar_lea.vmem %s1, 138
  %v843 = vpack.c.bf16 0.0, %v841
  %844 = vst [vmem:[%s842] sm:$0x1] %v843
  %s845 = scalar_lea.vmem %s0, 308
  %v846 = vld [vmem:[%s845] sm:$0x3]
  %s847 = scalar_lea.vmem %s1, 154
  %v848 = vpack.c.bf16 0.0, %v846
  %849 = vst [vmem:[%s847] sm:$0x1] %v848
  %s850 = scalar_lea.vmem %s0, 340
  %v851 = vld [vmem:[%s850] sm:$0x3]
  %s852 = scalar_lea.vmem %s1, 170
  %v853 = vpack.c.bf16 0.0, %v851
  %854 = vst [vmem:[%s852] sm:$0x1] %v853
  %s855 = scalar_lea.vmem %s0, 372
  %v856 = vld [vmem:[%s855] sm:$0x3]
  %s857 = scalar_lea.vmem %s1, 186
  %v858 = vpack.c.bf16 0.0, %v856
  %859 = vst [vmem:[%s857] sm:$0x1] %v858
  %s860 = scalar_lea.vmem %s0, 404
  %v861 = vld [vmem:[%s860] sm:$0x3]
  %s862 = scalar_lea.vmem %s1, 202
  %v863 = vpack.c.bf16 0.0, %v861
  %864 = vst [vmem:[%s862] sm:$0x1] %v863
  %s865 = scalar_lea.vmem %s0, 436
  %v866 = vld [vmem:[%s865] sm:$0x3]
  %s867 = scalar_lea.vmem %s1, 218
  %v868 = vpack.c.bf16 0.0, %v866
  %869 = vst [vmem:[%s867] sm:$0x1] %v868
  %s870 = scalar_lea.vmem %s0, 468
  %v871 = vld [vmem:[%s870] sm:$0x3]
  %s872 = scalar_lea.vmem %s1, 234
  %v873 = vpack.c.bf16 0.0, %v871
  %874 = vst [vmem:[%s872] sm:$0x1] %v873
  %s875 = scalar_lea.vmem %s0, 500
  %v876 = vld [vmem:[%s875] sm:$0x3]
  %s877 = scalar_lea.vmem %s1, 250
  %v878 = vpack.c.bf16 0.0, %v876
  %879 = vst [vmem:[%s877] sm:$0x1] %v878
  %s880 = scalar_lea.vmem %s0, 22
  %v881 = vld [vmem:[%s880] sm:$0x3]
  %s882 = scalar_lea.vmem %s1, 11
  %v883 = vpack.c.bf16 0.0, %v881
  %884 = vst [vmem:[%s882] sm:$0x1] %v883
  %s885 = scalar_lea.vmem %s0, 54
  %v886 = vld [vmem:[%s885] sm:$0x3]
  %s887 = scalar_lea.vmem %s1, 27
  %v888 = vpack.c.bf16 0.0, %v886
  %889 = vst [vmem:[%s887] sm:$0x1] %v888
  %s890 = scalar_lea.vmem %s0, 86
  %v891 = vld [vmem:[%s890] sm:$0x3]
  %s892 = scalar_lea.vmem %s1, 43
  %v893 = vpack.c.bf16 0.0, %v891
  %894 = vst [vmem:[%s892] sm:$0x1] %v893
  %s895 = scalar_lea.vmem %s0, 118
  %v896 = vld [vmem:[%s895] sm:$0x3]
  %s897 = scalar_lea.vmem %s1, 59
  %v898 = vpack.c.bf16 0.0, %v896
  %899 = vst [vmem:[%s897] sm:$0x1] %v898
  %s900 = scalar_lea.vmem %s0, 150
  %v901 = vld [vmem:[%s900] sm:$0x3]
  %s902 = scalar_lea.vmem %s1, 75
  %v903 = vpack.c.bf16 0.0, %v901
  %904 = vst [vmem:[%s902] sm:$0x1] %v903
  %s905 = scalar_lea.vmem %s0, 182
  %v906 = vld [vmem:[%s905] sm:$0x3]
  %s907 = scalar_lea.vmem %s1, 91
  %v908 = vpack.c.bf16 0.0, %v906
  %909 = vst [vmem:[%s907] sm:$0x1] %v908
  %s910 = scalar_lea.vmem %s0, 214
  %v911 = vld [vmem:[%s910] sm:$0x3]
  %s912 = scalar_lea.vmem %s1, 107
  %v913 = vpack.c.bf16 0.0, %v911
  %914 = vst [vmem:[%s912] sm:$0x1] %v913
  %s915 = scalar_lea.vmem %s0, 246
  %v916 = vld [vmem:[%s915] sm:$0x3]
  %s917 = scalar_lea.vmem %s1, 123
  %v918 = vpack.c.bf16 0.0, %v916
  %919 = vst [vmem:[%s917] sm:$0x1] %v918
  %s920 = scalar_lea.vmem %s0, 278
  %v921 = vld [vmem:[%s920] sm:$0x3]
  %s922 = scalar_lea.vmem %s1, 139
  %v923 = vpack.c.bf16 0.0, %v921
  %924 = vst [vmem:[%s922] sm:$0x1] %v923
  %s925 = scalar_lea.vmem %s0, 310
  %v926 = vld [vmem:[%s925] sm:$0x3]
  %s927 = scalar_lea.vmem %s1, 155
  %v928 = vpack.c.bf16 0.0, %v926
  %929 = vst [vmem:[%s927] sm:$0x1] %v928
  %s930 = scalar_lea.vmem %s0, 342
  %v931 = vld [vmem:[%s930] sm:$0x3]
  %s932 = scalar_lea.vmem %s1, 171
  %v933 = vpack.c.bf16 0.0, %v931
  %934 = vst [vmem:[%s932] sm:$0x1] %v933
  %s935 = scalar_lea.vmem %s0, 374
  %v936 = vld [vmem:[%s935] sm:$0x3]
  %s937 = scalar_lea.vmem %s1, 187
  %v938 = vpack.c.bf16 0.0, %v936
  %939 = vst [vmem:[%s937] sm:$0x1] %v938
  %s940 = scalar_lea.vmem %s0, 406
  %v941 = vld [vmem:[%s940] sm:$0x3]
  %s942 = scalar_lea.vmem %s1, 203
  %v943 = vpack.c.bf16 0.0, %v941
  %944 = vst [vmem:[%s942] sm:$0x1] %v943
  %s945 = scalar_lea.vmem %s0, 438
  %v946 = vld [vmem:[%s945] sm:$0x3]
  %s947 = scalar_lea.vmem %s1, 219
  %v948 = vpack.c.bf16 0.0, %v946
  %949 = vst [vmem:[%s947] sm:$0x1] %v948
  %s950 = scalar_lea.vmem %s0, 470
  %v951 = vld [vmem:[%s950] sm:$0x3]
  %s952 = scalar_lea.vmem %s1, 235
  %v953 = vpack.c.bf16 0.0, %v951
  %954 = vst [vmem:[%s952] sm:$0x1] %v953
  %s955 = scalar_lea.vmem %s0, 502
  %v956 = vld [vmem:[%s955] sm:$0x3]
  %s957 = scalar_lea.vmem %s1, 251
  %v958 = vpack.c.bf16 0.0, %v956
  %959 = vst [vmem:[%s957] sm:$0x1] %v958
  %s960 = scalar_lea.vmem %s0, 24
  %v961 = vld [vmem:[%s960] sm:$0x3]
  %s962 = scalar_lea.vmem %s1, 12
  %v963 = vpack.c.bf16 0.0, %v961
  %964 = vst [vmem:[%s962] sm:$0x1] %v963
  %s965 = scalar_lea.vmem %s0, 56
  %v966 = vld [vmem:[%s965] sm:$0x3]
  %s967 = scalar_lea.vmem %s1, 28
  %v968 = vpack.c.bf16 0.0, %v966
  %969 = vst [vmem:[%s967] sm:$0x1] %v968
  %s970 = scalar_lea.vmem %s0, 88
  %v971 = vld [vmem:[%s970] sm:$0x3]
  %s972 = scalar_lea.vmem %s1, 44
  %v973 = vpack.c.bf16 0.0, %v971
  %974 = vst [vmem:[%s972] sm:$0x1] %v973
  %s975 = scalar_lea.vmem %s0, 120
  %v976 = vld [vmem:[%s975] sm:$0x3]
  %s977 = scalar_lea.vmem %s1, 60
  %v978 = vpack.c.bf16 0.0, %v976
  %979 = vst [vmem:[%s977] sm:$0x1] %v978
  %s980 = scalar_lea.vmem %s0, 152
  %v981 = vld [vmem:[%s980] sm:$0x3]
  %s982 = scalar_lea.vmem %s1, 76
  %v983 = vpack.c.bf16 0.0, %v981
  %984 = vst [vmem:[%s982] sm:$0x1] %v983
  %s985 = scalar_lea.vmem %s0, 184
  %v986 = vld [vmem:[%s985] sm:$0x3]
  %s987 = scalar_lea.vmem %s1, 92
  %v988 = vpack.c.bf16 0.0, %v986
  %989 = vst [vmem:[%s987] sm:$0x1] %v988
  %s990 = scalar_lea.vmem %s0, 216
  %v991 = vld [vmem:[%s990] sm:$0x3]
  %s992 = scalar_lea.vmem %s1, 108
  %v993 = vpack.c.bf16 0.0, %v991
  %994 = vst [vmem:[%s992] sm:$0x1] %v993
  %s995 = scalar_lea.vmem %s0, 248
  %v996 = vld [vmem:[%s995] sm:$0x3]
  %s997 = scalar_lea.vmem %s1, 124
  %v998 = vpack.c.bf16 0.0, %v996
  %999 = vst [vmem:[%s997] sm:$0x1] %v998
  %s1000 = scalar_lea.vmem %s0, 280
  %v1001 = vld [vmem:[%s1000] sm:$0x3]
  %s1002 = scalar_lea.vmem %s1, 140
  %v1003 = vpack.c.bf16 0.0, %v1001
  %1004 = vst [vmem:[%s1002] sm:$0x1] %v1003
  %s1005 = scalar_lea.vmem %s0, 312
  %v1006 = vld [vmem:[%s1005] sm:$0x3]
  %s1007 = scalar_lea.vmem %s1, 156
  %v1008 = vpack.c.bf16 0.0, %v1006
  %1009 = vst [vmem:[%s1007] sm:$0x1] %v1008
  %s1010 = scalar_lea.vmem %s0, 344
  %v1011 = vld [vmem:[%s1010] sm:$0x3]
  %s1012 = scalar_lea.vmem %s1, 172
  %v1013 = vpack.c.bf16 0.0, %v1011
  %1014 = vst [vmem:[%s1012] sm:$0x1] %v1013
  %s1015 = scalar_lea.vmem %s0, 376
  %v1016 = vld [vmem:[%s1015] sm:$0x3]
  %s1017 = scalar_lea.vmem %s1, 188
  %v1018 = vpack.c.bf16 0.0, %v1016
  %1019 = vst [vmem:[%s1017] sm:$0x1] %v1018
  %s1020 = scalar_lea.vmem %s0, 408
  %v1021 = vld [vmem:[%s1020] sm:$0x3]
  %s1022 = scalar_lea.vmem %s1, 204
  %v1023 = vpack.c.bf16 0.0, %v1021
  %1024 = vst [vmem:[%s1022] sm:$0x1] %v1023
  %s1025 = scalar_lea.vmem %s0, 440
  %v1026 = vld [vmem:[%s1025] sm:$0x3]
  %s1027 = scalar_lea.vmem %s1, 220
  %v1028 = vpack.c.bf16 0.0, %v1026
  %1029 = vst [vmem:[%s1027] sm:$0x1] %v1028
  %s1030 = scalar_lea.vmem %s0, 472
  %v1031 = vld [vmem:[%s1030] sm:$0x3]
  %s1032 = scalar_lea.vmem %s1, 236
  %v1033 = vpack.c.bf16 0.0, %v1031
  %1034 = vst [vmem:[%s1032] sm:$0x1] %v1033
  %s1035 = scalar_lea.vmem %s0, 504
  %v1036 = vld [vmem:[%s1035] sm:$0x3]
  %s1037 = scalar_lea.vmem %s1, 252
  %v1038 = vpack.c.bf16 0.0, %v1036
  %1039 = vst [vmem:[%s1037] sm:$0x1] %v1038
  %s1040 = scalar_lea.vmem %s0, 26
  %v1041 = vld [vmem:[%s1040] sm:$0x3]
  %s1042 = scalar_lea.vmem %s1, 13
  %v1043 = vpack.c.bf16 0.0, %v1041
  %1044 = vst [vmem:[%s1042] sm:$0x1] %v1043
  %s1045 = scalar_lea.vmem %s0, 58
  %v1046 = vld [vmem:[%s1045] sm:$0x3]
  %s1047 = scalar_lea.vmem %s1, 29
  %v1048 = vpack.c.bf16 0.0, %v1046
  %1049 = vst [vmem:[%s1047] sm:$0x1] %v1048
  %s1050 = scalar_lea.vmem %s0, 90
  %v1051 = vld [vmem:[%s1050] sm:$0x3]
  %s1052 = scalar_lea.vmem %s1, 45
  %v1053 = vpack.c.bf16 0.0, %v1051
  %1054 = vst [vmem:[%s1052] sm:$0x1] %v1053
  %s1055 = scalar_lea.vmem %s0, 122
  %v1056 = vld [vmem:[%s1055] sm:$0x3]
  %s1057 = scalar_lea.vmem %s1, 61
  %v1058 = vpack.c.bf16 0.0, %v1056
  %1059 = vst [vmem:[%s1057] sm:$0x1] %v1058
  %s1060 = scalar_lea.vmem %s0, 154
  %v1061 = vld [vmem:[%s1060] sm:$0x3]
  %s1062 = scalar_lea.vmem %s1, 77
  %v1063 = vpack.c.bf16 0.0, %v1061
  %1064 = vst [vmem:[%s1062] sm:$0x1] %v1063
  %s1065 = scalar_lea.vmem %s0, 186
  %v1066 = vld [vmem:[%s1065] sm:$0x3]
  %s1067 = scalar_lea.vmem %s1, 93
  %v1068 = vpack.c.bf16 0.0, %v1066
  %1069 = vst [vmem:[%s1067] sm:$0x1] %v1068
  %s1070 = scalar_lea.vmem %s0, 218
  %v1071 = vld [vmem:[%s1070] sm:$0x3]
  %s1072 = scalar_lea.vmem %s1, 109
  %v1073 = vpack.c.bf16 0.0, %v1071
  %1074 = vst [vmem:[%s1072] sm:$0x1] %v1073
  %s1075 = scalar_lea.vmem %s0, 250
  %v1076 = vld [vmem:[%s1075] sm:$0x3]
  %s1077 = scalar_lea.vmem %s1, 125
  %v1078 = vpack.c.bf16 0.0, %v1076
  %1079 = vst [vmem:[%s1077] sm:$0x1] %v1078
  %s1080 = scalar_lea.vmem %s0, 282
  %v1081 = vld [vmem:[%s1080] sm:$0x3]
  %s1082 = scalar_lea.vmem %s1, 141
  %v1083 = vpack.c.bf16 0.0, %v1081
  %1084 = vst [vmem:[%s1082] sm:$0x1] %v1083
  %s1085 = scalar_lea.vmem %s0, 314
  %v1086 = vld [vmem:[%s1085] sm:$0x3]
  %s1087 = scalar_lea.vmem %s1, 157
  %v1088 = vpack.c.bf16 0.0, %v1086
  %1089 = vst [vmem:[%s1087] sm:$0x1] %v1088
  %s1090 = scalar_lea.vmem %s0, 346
  %v1091 = vld [vmem:[%s1090] sm:$0x3]
  %s1092 = scalar_lea.vmem %s1, 173
  %v1093 = vpack.c.bf16 0.0, %v1091
  %1094 = vst [vmem:[%s1092] sm:$0x1] %v1093
  %s1095 = scalar_lea.vmem %s0, 378
  %v1096 = vld [vmem:[%s1095] sm:$0x3]
  %s1097 = scalar_lea.vmem %s1, 189
  %v1098 = vpack.c.bf16 0.0, %v1096
  %1099 = vst [vmem:[%s1097] sm:$0x1] %v1098
  %s1100 = scalar_lea.vmem %s0, 410
  %v1101 = vld [vmem:[%s1100] sm:$0x3]
  %s1102 = scalar_lea.vmem %s1, 205
  %v1103 = vpack.c.bf16 0.0, %v1101
  %1104 = vst [vmem:[%s1102] sm:$0x1] %v1103
  %s1105 = scalar_lea.vmem %s0, 442
  %v1106 = vld [vmem:[%s1105] sm:$0x3]
  %s1107 = scalar_lea.vmem %s1, 221
  %v1108 = vpack.c.bf16 0.0, %v1106
  %1109 = vst [vmem:[%s1107] sm:$0x1] %v1108
  %s1110 = scalar_lea.vmem %s0, 474
  %v1111 = vld [vmem:[%s1110] sm:$0x3]
  %s1112 = scalar_lea.vmem %s1, 237
  %v1113 = vpack.c.bf16 0.0, %v1111
  %1114 = vst [vmem:[%s1112] sm:$0x1] %v1113
  %s1115 = scalar_lea.vmem %s0, 506
  %v1116 = vld [vmem:[%s1115] sm:$0x3]
  %s1117 = scalar_lea.vmem %s1, 253
  %v1118 = vpack.c.bf16 0.0, %v1116
  %1119 = vst [vmem:[%s1117] sm:$0x1] %v1118
  %s1120 = scalar_lea.vmem %s0, 28
  %v1121 = vld [vmem:[%s1120] sm:$0x3]
  %s1122 = scalar_lea.vmem %s1, 14
  %v1123 = vpack.c.bf16 0.0, %v1121
  %1124 = vst [vmem:[%s1122] sm:$0x1] %v1123
  %s1125 = scalar_lea.vmem %s0, 60
  %v1126 = vld [vmem:[%s1125] sm:$0x3]
  %s1127 = scalar_lea.vmem %s1, 30
  %v1128 = vpack.c.bf16 0.0, %v1126
  %1129 = vst [vmem:[%s1127] sm:$0x1] %v1128
  %s1130 = scalar_lea.vmem %s0, 92
  %v1131 = vld [vmem:[%s1130] sm:$0x3]
  %s1132 = scalar_lea.vmem %s1, 46
  %v1133 = vpack.c.bf16 0.0, %v1131
  %1134 = vst [vmem:[%s1132] sm:$0x1] %v1133
  %s1135 = scalar_lea.vmem %s0, 124
  %v1136 = vld [vmem:[%s1135] sm:$0x3]
  %s1137 = scalar_lea.vmem %s1, 62
  %v1138 = vpack.c.bf16 0.0, %v1136
  %1139 = vst [vmem:[%s1137] sm:$0x1] %v1138
  %s1140 = scalar_lea.vmem %s0, 156
  %v1141 = vld [vmem:[%s1140] sm:$0x3]
  %s1142 = scalar_lea.vmem %s1, 78
  %v1143 = vpack.c.bf16 0.0, %v1141
  %1144 = vst [vmem:[%s1142] sm:$0x1] %v1143
  %s1145 = scalar_lea.vmem %s0, 188
  %v1146 = vld [vmem:[%s1145] sm:$0x3]
  %s1147 = scalar_lea.vmem %s1, 94
  %v1148 = vpack.c.bf16 0.0, %v1146
  %1149 = vst [vmem:[%s1147] sm:$0x1] %v1148
  %s1150 = scalar_lea.vmem %s0, 220
  %v1151 = vld [vmem:[%s1150] sm:$0x3]
  %s1152 = scalar_lea.vmem %s1, 110
  %v1153 = vpack.c.bf16 0.0, %v1151
  %1154 = vst [vmem:[%s1152] sm:$0x1] %v1153
  %s1155 = scalar_lea.vmem %s0, 252
  %v1156 = vld [vmem:[%s1155] sm:$0x3]
  %s1157 = scalar_lea.vmem %s1, 126
  %v1158 = vpack.c.bf16 0.0, %v1156
  %1159 = vst [vmem:[%s1157] sm:$0x1] %v1158
  %s1160 = scalar_lea.vmem %s0, 284
  %v1161 = vld [vmem:[%s1160] sm:$0x3]
  %s1162 = scalar_lea.vmem %s1, 142
  %v1163 = vpack.c.bf16 0.0, %v1161
  %1164 = vst [vmem:[%s1162] sm:$0x1] %v1163
  %s1165 = scalar_lea.vmem %s0, 316
  %v1166 = vld [vmem:[%s1165] sm:$0x3]
  %s1167 = scalar_lea.vmem %s1, 158
  %v1168 = vpack.c.bf16 0.0, %v1166
  %1169 = vst [vmem:[%s1167] sm:$0x1] %v1168
  %s1170 = scalar_lea.vmem %s0, 348
  %v1171 = vld [vmem:[%s1170] sm:$0x3]
  %s1172 = scalar_lea.vmem %s1, 174
  %v1173 = vpack.c.bf16 0.0, %v1171
  %1174 = vst [vmem:[%s1172] sm:$0x1] %v1173
  %s1175 = scalar_lea.vmem %s0, 380
  %v1176 = vld [vmem:[%s1175] sm:$0x3]
  %s1177 = scalar_lea.vmem %s1, 190
  %v1178 = vpack.c.bf16 0.0, %v1176
  %1179 = vst [vmem:[%s1177] sm:$0x1] %v1178
  %s1180 = scalar_lea.vmem %s0, 412
  %v1181 = vld [vmem:[%s1180] sm:$0x3]
  %s1182 = scalar_lea.vmem %s1, 206
  %v1183 = vpack.c.bf16 0.0, %v1181
  %1184 = vst [vmem:[%s1182] sm:$0x1] %v1183
  %s1185 = scalar_lea.vmem %s0, 444
  %v1186 = vld [vmem:[%s1185] sm:$0x3]
  %s1187 = scalar_lea.vmem %s1, 222
  %v1188 = vpack.c.bf16 0.0, %v1186
  %1189 = vst [vmem:[%s1187] sm:$0x1] %v1188
  %s1190 = scalar_lea.vmem %s0, 476
  %v1191 = vld [vmem:[%s1190] sm:$0x3]
  %s1192 = scalar_lea.vmem %s1, 238
  %v1193 = vpack.c.bf16 0.0, %v1191
  %1194 = vst [vmem:[%s1192] sm:$0x1] %v1193
  %s1195 = scalar_lea.vmem %s0, 508
  %v1196 = vld [vmem:[%s1195] sm:$0x3]
  %s1197 = scalar_lea.vmem %s1, 254
  %v1198 = vpack.c.bf16 0.0, %v1196
  %1199 = vst [vmem:[%s1197] sm:$0x1] %v1198
  %s1200 = scalar_lea.vmem %s0, 30
  %v1201 = vld [vmem:[%s1200] sm:$0x3]
  %s1202 = scalar_lea.vmem %s1, 15
  %v1203 = vpack.c.bf16 0.0, %v1201
  %1204 = vst [vmem:[%s1202] sm:$0x1] %v1203
  %s1205 = scalar_lea.vmem %s0, 62
  %v1206 = vld [vmem:[%s1205] sm:$0x3]
  %s1207 = scalar_lea.vmem %s1, 31
  %v1208 = vpack.c.bf16 0.0, %v1206
  %1209 = vst [vmem:[%s1207] sm:$0x1] %v1208
  %s1210 = scalar_lea.vmem %s0, 94
  %v1211 = vld [vmem:[%s1210] sm:$0x3]
  %s1212 = scalar_lea.vmem %s1, 47
  %v1213 = vpack.c.bf16 0.0, %v1211
  %1214 = vst [vmem:[%s1212] sm:$0x1] %v1213
  %s1215 = scalar_lea.vmem %s0, 126
  %v1216 = vld [vmem:[%s1215] sm:$0x3]
  %s1217 = scalar_lea.vmem %s1, 63
  %v1218 = vpack.c.bf16 0.0, %v1216
  %1219 = vst [vmem:[%s1217] sm:$0x1] %v1218
  %s1220 = scalar_lea.vmem %s0, 158
  %v1221 = vld [vmem:[%s1220] sm:$0x3]
  %s1222 = scalar_lea.vmem %s1, 79
  %v1223 = vpack.c.bf16 0.0, %v1221
  %1224 = vst [vmem:[%s1222] sm:$0x1] %v1223
  %s1225 = scalar_lea.vmem %s0, 190
  %v1226 = vld [vmem:[%s1225] sm:$0x3]
  %s1227 = scalar_lea.vmem %s1, 95
  %v1228 = vpack.c.bf16 0.0, %v1226
  %1229 = vst [vmem:[%s1227] sm:$0x1] %v1228
  %s1230 = scalar_lea.vmem %s0, 222
  %v1231 = vld [vmem:[%s1230] sm:$0x3]
  %s1232 = scalar_lea.vmem %s1, 111
  %v1233 = vpack.c.bf16 0.0, %v1231
  %1234 = vst [vmem:[%s1232] sm:$0x1] %v1233
  %s1235 = scalar_lea.vmem %s0, 254
  %v1236 = vld [vmem:[%s1235] sm:$0x3]
  %s1237 = scalar_lea.vmem %s1, 127
  %v1238 = vpack.c.bf16 0.0, %v1236
  %1239 = vst [vmem:[%s1237] sm:$0x1] %v1238
  %s1240 = scalar_lea.vmem %s0, 286
  %v1241 = vld [vmem:[%s1240] sm:$0x3]
  %s1242 = scalar_lea.vmem %s1, 143
  %v1243 = vpack.c.bf16 0.0, %v1241
  %1244 = vst [vmem:[%s1242] sm:$0x1] %v1243
  %s1245 = scalar_lea.vmem %s0, 318
  %v1246 = vld [vmem:[%s1245] sm:$0x3]
  %s1247 = scalar_lea.vmem %s1, 159
  %v1248 = vpack.c.bf16 0.0, %v1246
  %1249 = vst [vmem:[%s1247] sm:$0x1] %v1248
  %s1250 = scalar_lea.vmem %s0, 350
  %v1251 = vld [vmem:[%s1250] sm:$0x3]
  %s1252 = scalar_lea.vmem %s1, 175
  %v1253 = vpack.c.bf16 0.0, %v1251
  %1254 = vst [vmem:[%s1252] sm:$0x1] %v1253
  %s1255 = scalar_lea.vmem %s0, 382
  %v1256 = vld [vmem:[%s1255] sm:$0x3]
  %s1257 = scalar_lea.vmem %s1, 191
  %v1258 = vpack.c.bf16 0.0, %v1256
  %1259 = vst [vmem:[%s1257] sm:$0x1] %v1258
  %s1260 = scalar_lea.vmem %s0, 414
  %v1261 = vld [vmem:[%s1260] sm:$0x3]
  %s1262 = scalar_lea.vmem %s1, 207
  %v1263 = vpack.c.bf16 0.0, %v1261
  %1264 = vst [vmem:[%s1262] sm:$0x1] %v1263
  %s1265 = scalar_lea.vmem %s0, 446
  %v1266 = vld [vmem:[%s1265] sm:$0x3]
  %s1267 = scalar_lea.vmem %s1, 223
  %v1268 = vpack.c.bf16 0.0, %v1266
  %1269 = vst [vmem:[%s1267] sm:$0x1] %v1268
  %s1270 = scalar_lea.vmem %s0, 478
  %v1271 = vld [vmem:[%s1270] sm:$0x3]
  %s1272 = scalar_lea.vmem %s1, 239
  %v1273 = vpack.c.bf16 0.0, %v1271
  %1274 = vst [vmem:[%s1272] sm:$0x1] %v1273
  %s1275 = scalar_lea.vmem %s0, 510
  %v1276 = vld [vmem:[%s1275] sm:$0x3]
  %s1277 = scalar_lea.vmem %s1, 255
  %v1278 = vpack.c.bf16 0.0, %v1276
  %1279 = vst [vmem:[%s1277] sm:$0x1] %v1278

</llo_original>
